<compile_context>
chip_gen: v7x
topology: tpu7x:2x2x1
jax: 0.10.0
libtpu: 0.0.40
codegen_flags: <defaults>
</compile_context>

<pallas_src>
import functools

import jax
import jax.numpy as jnp
from jax import lax
from jax.experimental import pallas as pl
from jax.experimental.pallas import tpu as pltpu


# --------------------------------------------------------------------------- #
# helpers
# --------------------------------------------------------------------------- #
def _rmsnorm_f32(h, w, eps):
    var = jnp.mean(h * h, axis=-1, keepdims=True)
    return w * (h * lax.rsqrt(var + eps))


def _rotate_half(x):
    d = x.shape[-1] // 2
    return jnp.concatenate([-x[:, d:], x[:, :d]], axis=-1)


# --------------------------------------------------------------------------- #
# Kernel 1: RMSNorm1 + QKV projection + RoPE.   grid = (B, S // tq)
# --------------------------------------------------------------------------- #
def qkv_rope_kernel(num_heads, num_kv_heads, head_dim, eps, scaling,
                    x_ref, cos_ref, sin_ref, n1w_ref,
                    wq_ref, bq_ref, wk_ref, bk_ref, wv_ref, bv_ref,
                    q_ref, k_ref, v_ref):
    x = x_ref[0].astype(jnp.float32)                       # (tq, H) f32
    n1 = _rmsnorm_f32(x, n1w_ref[...], eps)                # f32 norm math
    n1b = n1.astype(jnp.bfloat16)                          # bf16 MXU operand

    q = jnp.dot(n1b, wq_ref[...], preferred_element_type=jnp.float32) + bq_ref[...]
    k = jnp.dot(n1b, wk_ref[...], preferred_element_type=jnp.float32) + bk_ref[...]
    v = jnp.dot(n1b, wv_ref[...], preferred_element_type=jnp.float32) + bv_ref[...]

    cos = cos_ref[0]                                       # (tq, hd) f32, precomputed
    sin = sin_ref[0]

    hd = head_dim
    for h in range(num_heads):                             # static unroll (small)
        qh = q[:, h * hd:(h + 1) * hd]
        qh = (qh * cos + _rotate_half(qh) * sin) * scaling  # scale folded into q
        q_ref[0, h] = qh.astype(q_ref.dtype)
    for h in range(num_kv_heads):
        kh = k[:, h * hd:(h + 1) * hd]
        kh = kh * cos + _rotate_half(kh) * sin
        k_ref[0, h] = kh.astype(k_ref.dtype)
        v_ref[0, h] = v[:, h * hd:(h + 1) * hd].astype(v_ref.dtype)


# --------------------------------------------------------------------------- #
# Kernel 2: flash attention (online softmax).  grid = (B, nh, S//tq, S//tk)
# --------------------------------------------------------------------------- #
def flash_attn_kernel(q_ref, k_ref, v_ref, o_ref, m_ref, l_ref, acc_ref):
    ki = pl.program_id(3)

    @pl.when(ki == 0)
    def _():
        m_ref[...] = jnp.full(m_ref.shape, -jnp.inf, m_ref.dtype)
        l_ref[...] = jnp.zeros(l_ref.shape, l_ref.dtype)
        acc_ref[...] = jnp.zeros(acc_ref.shape, acc_ref.dtype)

    q = q_ref[0, 0]                                        # (tq, hd) bf16 (pre-scaled)
    k = k_ref[0, 0]                                        # (tk, hd) bf16
    v = v_ref[0, 0]                                        # (tk, hd) bf16

    # contract last dims directly -- no explicit k transpose
    s = lax.dot_general(q, k, (((1,), (1,)), ((), ())),
                        preferred_element_type=jnp.float32)  # (tq, tk) f32

    m_prev = m_ref[...]
    m_new = jnp.maximum(m_prev, jnp.max(s, axis=-1, keepdims=True))
    alpha = jnp.exp(m_prev - m_new)
    p = jnp.exp(s - m_new)                                  # f32 softmax numerator
    l_ref[...] = alpha * l_ref[...] + jnp.sum(p, axis=-1, keepdims=True)
    acc_ref[...] = alpha * acc_ref[...] + jnp.dot(
        p.astype(jnp.bfloat16), v, preferred_element_type=jnp.float32)
    m_ref[...] = m_new

    # TODO(synk): attention dropout omitted (eval semantics, p=0.0)
    @pl.when(ki == pl.num_programs(3) - 1)
    def _():
        inv_l = pl.reciprocal(l_ref[...], approx=True)      # EUP slot, ~free vs exp
        o_ref[0, 0] = (acc_ref[...] * inv_l).astype(o_ref.dtype)


# --------------------------------------------------------------------------- #
# Kernel 3: o-proj + residual + norm2 + tiled MLP + residual.
# grid = (B, S//tq, I//ti)  (intermediate axis innermost / "arbitrary")
# --------------------------------------------------------------------------- #
def oproj_mlp_kernel(num_heads, eps,
                     x_ref, attn_ref, wo_ref, n2w_ref, wg_ref, wu_ref, wd_ref,
                     o_ref, h1_ref, n2_ref, acc_ref):
    it = pl.program_id(2)

    @pl.when(it == 0)
    def _():
        heads = attn_ref[0]                                  # (nh, tq, hd) bf16
        attn_flat = jnp.concatenate(
            [heads[h] for h in range(num_heads)], axis=-1)   # (tq, H) bf16
        attn_o = jnp.dot(attn_flat, wo_ref[...],
                         preferred_element_type=jnp.float32)
        h1 = x_ref[0].astype(jnp.float32) + attn_o           # residual 1 (f32)
        h1_ref[...] = h1
        n2_ref[...] = _rmsnorm_f32(h1, n2w_ref[...], eps).astype(n2_ref.dtype)
        acc_ref[...] = jnp.zeros(acc_ref.shape, acc_ref.dtype)

    n2 = n2_ref[...]                                         # (tq, H) bf16
    gate = jnp.dot(n2, wg_ref[...], preferred_element_type=jnp.float32)
    up = jnp.dot(n2, wu_ref[...], preferred_element_type=jnp.float32)
    act = (gate * jax.nn.sigmoid(gate)) * up                 # SiLU(gate) * up, f32
    acc_ref[...] += jnp.dot(act.astype(jnp.bfloat16), wd_ref[...],
                            preferred_element_type=jnp.float32)

    @pl.when(it == pl.num_programs(2) - 1)
    def _():
        o_ref[0] = (h1_ref[...] + acc_ref[...]).astype(o_ref.dtype)


# --------------------------------------------------------------------------- #
# Wrapper
# --------------------------------------------------------------------------- #
def encoder_layer(x, freqs, params, num_heads, num_kv_heads,
                  *, q_tile=256, kv_tile=512, inter_tile=512, eps=1e-6):
    B, S, H = x.shape
    head_dim = H // num_heads
    groups = num_heads // num_kv_heads
    inter = params["wg"].shape[1]
    scaling = head_dim ** -0.5

    tq = S if S <= q_tile else q_tile
    tk = S if S <= kv_tile else kv_tile
    ti = inter if inter <= inter_tile else inter_tile
    assert S % tq == 0 and S % tk == 0 and inter % ti == 0

    n_qt, n_kt, n_it = S // tq, S // tk, inter // ti
    f32, bf16 = jnp.float32, jnp.bfloat16

    # Lane-dense rotary tables, computed once outside the kernels.
    fr = freqs.astype(f32)
    cos = jnp.concatenate([jnp.cos(fr), jnp.cos(fr)], axis=-1)   # (B, S, hd)
    sin = jnp.concatenate([jnp.sin(fr), jnp.sin(fr)], axis=-1)

    # bf16 MXU operands; biases / norm scales stay f32.
    wq = params["wq"].astype(bf16)
    wk = params["wk"].astype(bf16)
    wv = params["wv"].astype(bf16)
    wo = params["wo"].astype(bf16)
    wg = params["wg"].astype(bf16)
    wu = params["wu"].astype(bf16)
    wd = params["wd"].astype(bf16)
    bq, bk, bv = params["bq"], params["bk"], params["bv"]
    n1w, n2w = params["norm1_w"], params["norm2_w"]

    def cparams(sem):
        return pltpu.CompilerParams(dimension_semantics=sem,
                                    vmem_limit_bytes=64 * 1024 * 1024)

    # ---- stage 1: norm1 + qkv + rope --------------------------------------
    q, k, v = pl.pallas_call(
        functools.partial(qkv_rope_kernel, num_heads, num_kv_heads, head_dim,
                          eps, scaling),
        grid=(B, n_qt),
        in_specs=[
            pl.BlockSpec((1, tq, H), lambda b, i: (b, i, 0)),
            pl.BlockSpec((1, tq, head_dim), lambda b, i: (b, i, 0)),
            pl.BlockSpec((1, tq, head_dim), lambda b, i: (b, i, 0)),
            pl.BlockSpec(n1w.shape, lambda b, i: (0, 0)),
            pl.BlockSpec(wq.shape, lambda b, i: (0, 0)),
            pl.BlockSpec(bq.shape, lambda b, i: (0, 0)),
            pl.BlockSpec(wk.shape, lambda b, i: (0, 0)),
            pl.BlockSpec(bk.shape, lambda b, i: (0, 0)),
            pl.BlockSpec(wv.shape, lambda b, i: (0, 0)),
            pl.BlockSpec(bv.shape, lambda b, i: (0, 0)),
        ],
        out_specs=(
            pl.BlockSpec((1, num_heads, tq, head_dim), lambda b, i: (b, 0, i, 0)),
            pl.BlockSpec((1, num_kv_heads, tq, head_dim), lambda b, i: (b, 0, i, 0)),
            pl.BlockSpec((1, num_kv_heads, tq, head_dim), lambda b, i: (b, 0, i, 0)),
        ),
        out_shape=(
            jax.ShapeDtypeStruct((B, num_heads, S, head_dim), bf16),
            jax.ShapeDtypeStruct((B, num_kv_heads, S, head_dim), bf16),
            jax.ShapeDtypeStruct((B, num_kv_heads, S, head_dim), bf16),
        ),
        compiler_params=cparams(("parallel", "parallel")),
    )(x, cos, sin, n1w, wq, bq, wk, bk, wv, bv)

    # ---- stage 2: flash attention (GQA via k/v index_map) ------------------
    attn = pl.pallas_call(
        flash_attn_kernel,
        grid=(B, num_heads, n_qt, n_kt),
        in_specs=[
            pl.BlockSpec((1, 1, tq, head_dim), lambda b, h, i, j: (b, h, i, 0)),
            pl.BlockSpec((1, 1, tk, head_dim),
                         lambda b, h, i, j: (b, h // groups, j, 0)),
            pl.BlockSpec((1, 1, tk, head_dim),
                         lambda b, h, i, j: (b, h // groups, j, 0)),
        ],
        out_specs=pl.BlockSpec((1, 1, tq, head_dim),
                               lambda b, h, i, j: (b, h, i, 0)),
        out_shape=jax.ShapeDtypeStruct((B, num_heads, S, head_dim), bf16),
        scratch_shapes=[
            pltpu.VMEM((tq, 1), f32),           # running max
            pltpu.VMEM((tq, 1), f32),           # running denominator
            pltpu.VMEM((tq, head_dim), f32),    # output accumulator
        ],
        compiler_params=cparams(("parallel", "parallel", "parallel", "arbitrary")),
    )(q, k, v)

    # ---- stage 3: o-proj + residual + norm2 + tiled MLP + residual ---------
    out = pl.pallas_call(
        functools.partial(oproj_mlp_kernel, num_heads, eps),
        grid=(B, n_qt, n_it),
        in_specs=[
            pl.BlockSpec((1, tq, H), lambda b, i, j: (b, i, 0)),
            pl.BlockSpec((1, num_heads, tq, head_dim), lambda b, i, j: (b, 0, i, 0)),
            pl.BlockSpec(wo.shape, lambda b, i, j: (0, 0)),
            pl.BlockSpec(n2w.shape, lambda b, i, j: (0, 0)),
            pl.BlockSpec((H, ti), lambda b, i, j: (0, j)),
            pl.BlockSpec((H, ti), lambda b, i, j: (0, j)),
            pl.BlockSpec((ti, H), lambda b, i, j: (j, 0)),
        ],
        out_specs=pl.BlockSpec((1, tq, H), lambda b, i, j: (b, i, 0)),
        out_shape=jax.ShapeDtypeStruct((B, S, H), x.dtype),
        scratch_shapes=[
            pltpu.VMEM((tq, H), f32),           # h1 residual (f32)
            pltpu.VMEM((tq, H), bf16),          # norm2 output (MXU operand)
            pltpu.VMEM((tq, H), f32),           # down-proj accumulator
        ],
        compiler_params=cparams(("parallel", "parallel", "arbitrary")),
    )(x, attn, wo, n2w, wg, wu, wd)

    return out


# --------------------------------------------------------------------------- #
# Pure-JAX reference (mirrors the PyTorch forward).  mxu_dtype=bf16 mimics the
# kernel's mixed-precision policy for a tight comparison.
# --------------------------------------------------------------------------- #
def reference_encoder_layer(x, freqs, p, num_heads, num_kv_heads, mxu_dtype=None):
    B, S, H = x.shape
    hd = H // num_heads
    groups = num_heads // num_kv_heads
    eps = 1e-6

    def mm(a, b):
        if mxu_dtype is not None:
            a, b = a.astype(mxu_dtype), b.astype(mxu_dtype)
        return jnp.dot(a, b, preferred_element_type=jnp.float32)

    def bmm(eq, a, b):
        if mxu_dtype is not None:
            a, b = a.astype(mxu_dtype), b.astype(mxu_dtype)
        return jnp.einsum(eq, a, b, preferred_element_type=jnp.float32)

    def rmsnorm(h, w):
        var = jnp.mean(h.astype(jnp.float32) ** 2, axis=-1, keepdims=True)
        return w * (h * lax.rsqrt(var + eps))

    def rope(t, fr):                        # t: (B,nH,S,hd), fr: (B,S,hd//2)
        cos = jnp.concatenate([jnp.cos(fr), jnp.cos(fr)], -1)[:, None]
        sin = jnp.concatenate([jnp.sin(fr), jnp.sin(fr)], -1)[:, None]
        d = t.shape[-1] // 2
        rot = jnp.concatenate([-t[..., d:], t[..., :d]], -1)
        return t * cos + rot * sin

    n1 = rmsnorm(x, p["norm1_w"][0])
    q = (mm(n1, p["wq"]) + p["bq"][0]).reshape(B, S, num_heads, hd).transpose(0, 2, 1, 3)
    k = (mm(n1, p["wk"]) + p["bk"][0]).reshape(B, S, num_kv_heads, hd).transpose(0, 2, 1, 3)
    v = (mm(n1, p["wv"]) + p["bv"][0]).reshape(B, S, num_kv_heads, hd).transpose(0, 2, 1, 3)
    q, k = rope(q, freqs), rope(k, freqs)
    k = jnp.repeat(k, groups, axis=1)
    v = jnp.repeat(v, groups, axis=1)
    w = bmm("bhqd,bhkd->bhqk", q, k) * (hd ** -0.5)
    w = jax.nn.softmax(w.astype(jnp.float32), axis=-1)
    o = bmm("bhqk,bhkd->bhqd", w, v).transpose(0, 2, 1, 3).reshape(B, S, H)
    h1 = x + mm(o, p["wo"])
    n2 = rmsnorm(h1, p["norm2_w"][0])
    gate = mm(n2, p["wg"])
    gate = gate * jax.nn.sigmoid(gate)
    return h1 + mm(gate * mm(n2, p["wu"]), p["wd"])


# --------------------------------------------------------------------------- #
# Main
# --------------------------------------------------------------------------- #
if __name__ == "__main__":
    B, S, H = 2, 8, 32
    num_heads, num_kv_heads = 4, 2
    head_dim = H // num_heads
    intermediate = 64

    key = jax.random.PRNGKey(0)
    ks = jax.random.split(key, 16)
    f32 = jnp.float32

    x = jax.random.normal(ks[0], (B, S, H), f32)
    freqs = jax.random.normal(ks[1], (B, S, head_dim // 2), f32)

    # weights stored as (in, out) so kernels compute y = x @ W (+ b)
    params = {
        "norm1_w": jnp.ones((1, H), f32),
        "wq": 0.1 * jax.random.normal(ks[2], (H, num_heads * head_dim), f32),
        "bq": 0.1 * jax.random.normal(ks[3], (1, num_heads * head_dim), f32),
        "wk": 0.1 * jax.random.normal(ks[4], (H, num_kv_heads * head_dim), f32),
        "bk": 0.1 * jax.random.normal(ks[5], (1, num_kv_heads * head_dim), f32),
        "wv": 0.1 * jax.random.normal(ks[6], (H, num_kv_heads * head_dim), f32),
        "bv": 0.1 * jax.random.normal(ks[7], (1, num_kv_heads * head_dim), f32),
        "wo": 0.1 * jax.random.normal(ks[8], (num_heads * head_dim, H), f32),
        "norm2_w": jnp.ones((1, H), f32),
        "wg": 0.1 * jax.random.normal(ks[9], (H, intermediate), f32),
        "wu": 0.1 * jax.random.normal(ks[10], (H, intermediate), f32),
        "wd": 0.1 * jax.random.normal(ks[11], (intermediate, H), f32),
    }

    out = encoder_layer(x, freqs, params, num_heads, num_kv_heads)
    out = jax.block_until_ready(out)

    ref_bf16 = reference_encoder_layer(x, freqs, params, num_heads, num_kv_heads,
                                       mxu_dtype=jnp.bfloat16)
    ref_f32 = reference_encoder_layer(x, freqs, params, num_heads, num_kv_heads)
    assert jnp.allclose(out, ref_bf16, atol=2e-2, rtol=2e-2), "mismatch vs bf16 reference"
    assert jnp.allclose(out, ref_f32, atol=1e-1, rtol=1e-1), "mismatch vs f32 reference"

    print("KERNEL_OK")
</pallas_src>

<mosaic_0001>
module attributes {stable_mosaic.version = 11 : i64} {
  func.func @qkv_rope_kernel(%arg0: i32, %arg1: i32, %arg2: memref<1x8x32xf32, #tpu.memory_space<vmem>>, %arg3: memref<1x8x8xf32, #tpu.memory_space<vmem>>, %arg4: memref<1x8x8xf32, #tpu.memory_space<vmem>>, %arg5: memref<1x32xf32, #tpu.memory_space<vmem>>, %arg6: memref<32x32xbf16, #tpu.memory_space<vmem>>, %arg7: memref<1x32xf32, #tpu.memory_space<vmem>>, %arg8: memref<32x16xbf16, #tpu.memory_space<vmem>>, %arg9: memref<1x16xf32, #tpu.memory_space<vmem>>, %arg10: memref<32x16xbf16, #tpu.memory_space<vmem>>, %arg11: memref<1x16xf32, #tpu.memory_space<vmem>>, %arg12: memref<1x4x8x8xbf16, #tpu.memory_space<vmem>>, %arg13: memref<1x2x8x8xbf16, #tpu.memory_space<vmem>>, %arg14: memref<1x2x8x8xbf16, #tpu.memory_space<vmem>>) attributes {dimension_semantics = [#tpu.dimension_semantics<parallel>, #tpu.dimension_semantics<parallel>], iteration_bounds = array<i64: 2, 1>, scalar_prefetch = 0 : i64, scratch_operands = 0 : i64, tpu.core_type = #tpu.core_type<tc>, window_params = [{transform_indices = @transform_0, window_bounds = array<i64: 1, 8, 32>}, {transform_indices = @transform_1, window_bounds = array<i64: 1, 8, 8>}, {transform_indices = @transform_2, window_bounds = array<i64: 1, 8, 8>}, {pipeline_mode = #tpu.pipeline_mode<synchronous>, transform_indices = @transform_3, window_bounds = array<i64: 1, 32>}, {pipeline_mode = #tpu.pipeline_mode<synchronous>, transform_indices = @transform_4, window_bounds = array<i64: 32, 32>}, {pipeline_mode = #tpu.pipeline_mode<synchronous>, transform_indices = @transform_5, window_bounds = array<i64: 1, 32>}, {pipeline_mode = #tpu.pipeline_mode<synchronous>, transform_indices = @transform_6, window_bounds = array<i64: 32, 16>}, {pipeline_mode = #tpu.pipeline_mode<synchronous>, transform_indices = @transform_7, window_bounds = array<i64: 1, 16>}, {pipeline_mode = #tpu.pipeline_mode<synchronous>, transform_indices = @transform_8, window_bounds = array<i64: 32, 16>}, {pipeline_mode = #tpu.pipeline_mode<synchronous>, transform_indices = @transform_9, window_bounds = array<i64: 1, 16>}, {transform_indices = @transform_10, window_bounds = array<i64: 1, 4, 8, 8>}, {transform_indices = @transform_11, window_bounds = array<i64: 1, 2, 8, 8>}, {transform_indices = @transform_12, window_bounds = array<i64: 1, 2, 8, 8>}]} {
    %c0 = arith.constant 0 : index
    %c0_0 = arith.constant 0 : index
    %c0_1 = arith.constant 0 : index
    %0 = vector.load %arg2[%c0, %c0_0, %c0_1] : memref<1x8x32xf32, #tpu.memory_space<vmem>>, vector<1x8x32xf32>
    %1 = vector.shape_cast %0 : vector<1x8x32xf32> to vector<8x32xf32>
    %c0_2 = arith.constant 0 : index
    %c0_3 = arith.constant 0 : index
    %2 = vector.load %arg5[%c0_2, %c0_3] : memref<1x32xf32, #tpu.memory_space<vmem>>, vector<1x32xf32>
    %3 = arith.mulf %1, %1 : vector<8x32xf32>
    %cst = arith.constant dense<0.000000e+00> : vector<8xf32>
    %4 = vector.multi_reduction <add>, %3, %cst [1] : vector<8x32xf32> to vector<8xf32>
    %5 = vector.shape_cast %4 : vector<8xf32> to vector<8x1xf32>
    %cst_4 = arith.constant 3.200000e+01 : f32
    %6 = vector.broadcast %cst_4 : f32 to vector<8x1xf32>
    %7 = arith.divf %5, %6 : vector<8x1xf32>
    %cst_5 = arith.constant 9.99999997E-7 : f32
    %8 = vector.broadcast %cst_5 : f32 to vector<8x1xf32>
    %9 = arith.addf %7, %8 : vector<8x1xf32>
    %10 = math.rsqrt %9 : vector<8x1xf32>
    %11 = vector.broadcast %10 : vector<8x1xf32> to vector<8x32xf32>
    %12 = arith.mulf %1, %11 : vector<8x32xf32>
    %13 = vector.broadcast %2 : vector<1x32xf32> to vector<8x32xf32>
    %14 = arith.mulf %13, %12 : vector<8x32xf32>
    %15 = arith.truncf %14 : vector<8x32xf32> to vector<8x32xbf16>
    %c0_6 = arith.constant 0 : index
    %c0_7 = arith.constant 0 : index
    %16 = vector.load %arg6[%c0_6, %c0_7] : memref<32x32xbf16, #tpu.memory_space<vmem>>, vector<32x32xbf16>
    %cst_8 = arith.constant dense<0.000000e+00> : vector<8x32xf32>
    %17 = tpu.matmul %15, %16, %cst_8 {dimension_numbers = #tpu.dot_dimension_numbers<[1], [0], [0], [1], [0, 0, 1, 1], [], []>} : vector<8x32xbf16>, vector<32x32xbf16>, vector<8x32xf32> -> vector<8x32xf32>
    %c0_9 = arith.constant 0 : index
    %c0_10 = arith.constant 0 : index
    %18 = vector.load %arg7[%c0_9, %c0_10] : memref<1x32xf32, #tpu.memory_space<vmem>>, vector<1x32xf32>
    %19 = vector.broadcast %18 : vector<1x32xf32> to vector<8x32xf32>
    %20 = arith.addf %17, %19 : vector<8x32xf32>
    %c0_11 = arith.constant 0 : index
    %c0_12 = arith.constant 0 : index
    %21 = vector.load %arg8[%c0_11, %c0_12] : memref<32x16xbf16, #tpu.memory_space<vmem>>, vector<32x16xbf16>
    %cst_13 = arith.constant dense<0.000000e+00> : vector<8x16xf32>
    %22 = tpu.matmul %15, %21, %cst_13 {dimension_numbers = #tpu.dot_dimension_numbers<[1], [0], [0], [1], [0, 0, 1, 1], [], []>} : vector<8x32xbf16>, vector<32x16xbf16>, vector<8x16xf32> -> vector<8x16xf32>
    %c0_14 = arith.constant 0 : index
    %c0_15 = arith.constant 0 : index
    %23 = vector.load %arg9[%c0_14, %c0_15] : memref<1x16xf32, #tpu.memory_space<vmem>>, vector<1x16xf32>
    %24 = vector.broadcast %23 : vector<1x16xf32> to vector<8x16xf32>
    %25 = arith.addf %22, %24 : vector<8x16xf32>
    %c0_16 = arith.constant 0 : index
    %c0_17 = arith.constant 0 : index
    %26 = vector.load %arg10[%c0_16, %c0_17] : memref<32x16xbf16, #tpu.memory_space<vmem>>, vector<32x16xbf16>
    %cst_18 = arith.constant dense<0.000000e+00> : vector<8x16xf32>
    %27 = tpu.matmul %15, %26, %cst_18 {dimension_numbers = #tpu.dot_dimension_numbers<[1], [0], [0], [1], [0, 0, 1, 1], [], []>} : vector<8x32xbf16>, vector<32x16xbf16>, vector<8x16xf32> -> vector<8x16xf32>
    %c0_19 = arith.constant 0 : index
    %c0_20 = arith.constant 0 : index
    %28 = vector.load %arg11[%c0_19, %c0_20] : memref<1x16xf32, #tpu.memory_space<vmem>>, vector<1x16xf32>
    %29 = vector.broadcast %28 : vector<1x16xf32> to vector<8x16xf32>
    %30 = arith.addf %27, %29 : vector<8x16xf32>
    %c0_21 = arith.constant 0 : index
    %c0_22 = arith.constant 0 : index
    %c0_23 = arith.constant 0 : index
    %31 = vector.load %arg3[%c0_21, %c0_22, %c0_23] : memref<1x8x8xf32, #tpu.memory_space<vmem>>, vector<1x8x8xf32>
    %32 = vector.shape_cast %31 : vector<1x8x8xf32> to vector<8x8xf32>
    %c0_24 = arith.constant 0 : index
    %c0_25 = arith.constant 0 : index
    %c0_26 = arith.constant 0 : index
    %33 = vector.load %arg4[%c0_24, %c0_25, %c0_26] : memref<1x8x8xf32, #tpu.memory_space<vmem>>, vector<1x8x8xf32>
    %34 = vector.shape_cast %33 : vector<1x8x8xf32> to vector<8x8xf32>
    %35 = vector.extract_strided_slice %20 {offsets = [0, 0], sizes = [8, 8], strides = [1, 1]} : vector<8x32xf32> to vector<8x8xf32>
    %36 = arith.mulf %35, %32 : vector<8x8xf32>
    %37 = vector.extract_strided_slice %35 {offsets = [0, 4], sizes = [8, 4], strides = [1, 1]} : vector<8x8xf32> to vector<8x4xf32>
    %cst_27 = arith.constant 0.000000e+00 : f32
    %38 = vector.broadcast %cst_27 : f32 to vector<8x4xf32>
    %39 = arith.subf %38, %37 : vector<8x4xf32>
    %40 = vector.extract_strided_slice %35 {offsets = [0, 0], sizes = [8, 4], strides = [1, 1]} : vector<8x8xf32> to vector<8x4xf32>
    %41 = tpu.concatenate %39, %40 in 1 : vector<8x4xf32>, vector<8x4xf32> -> vector<8x8xf32>
    %42 = arith.mulf %41, %34 : vector<8x8xf32>
    %43 = arith.addf %36, %42 : vector<8x8xf32>
    %cst_28 = arith.constant 0.353553385 : f32
    %44 = vector.broadcast %cst_28 : f32 to vector<8x8xf32>
    %45 = arith.mulf %43, %44 : vector<8x8xf32>
    %46 = arith.truncf %45 : vector<8x8xf32> to vector<8x8xbf16>
    %c0_29 = arith.constant 0 : index
    %c0_30 = arith.constant 0 : index
    %c0_31 = arith.constant 0 : index
    %c0_32 = arith.constant 0 : index
    %47 = vector.load %arg12[%c0_29, %c0_30, %c0_31, %c0_32] : memref<1x4x8x8xbf16, #tpu.memory_space<vmem>>, vector<1x1x8x8xbf16>
    %48 = vector.shape_cast %47 : vector<1x1x8x8xbf16> to vector<8x8xbf16>
    %49 = vector.shape_cast %46 : vector<8x8xbf16> to vector<1x1x8x8xbf16>
    tpu.vector_store %arg12[%c0_29, %c0_30, %c0_31, %c0_32], %49 {strides = array<i32>} : memref<1x4x8x8xbf16, #tpu.memory_space<vmem>>, vector<1x1x8x8xbf16>,
    %50 = vector.extract_strided_slice %20 {offsets = [0, 8], sizes = [8, 8], strides = [1, 1]} : vector<8x32xf32> to vector<8x8xf32>
    %51 = arith.mulf %50, %32 : vector<8x8xf32>
    %52 = vector.extract_strided_slice %50 {offsets = [0, 4], sizes = [8, 4], strides = [1, 1]} : vector<8x8xf32> to vector<8x4xf32>
    %cst_33 = arith.constant 0.000000e+00 : f32
    %53 = vector.broadcast %cst_33 : f32 to vector<8x4xf32>
    %54 = arith.subf %53, %52 : vector<8x4xf32>
    %55 = vector.extract_strided_slice %50 {offsets = [0, 0], sizes = [8, 4], strides = [1, 1]} : vector<8x8xf32> to vector<8x4xf32>
    %56 = tpu.concatenate %54, %55 in 1 : vector<8x4xf32>, vector<8x4xf32> -> vector<8x8xf32>
    %57 = arith.mulf %56, %34 : vector<8x8xf32>
    %58 = arith.addf %51, %57 : vector<8x8xf32>
    %cst_34 = arith.constant 0.353553385 : f32
    %59 = vector.broadcast %cst_34 : f32 to vector<8x8xf32>
    %60 = arith.mulf %58, %59 : vector<8x8xf32>
    %61 = arith.truncf %60 : vector<8x8xf32> to vector<8x8xbf16>
    %c0_35 = arith.constant 0 : index
    %c1 = arith.constant 1 : index
    %c0_36 = arith.constant 0 : index
    %c0_37 = arith.constant 0 : index
    %62 = vector.load %arg12[%c0_35, %c1, %c0_36, %c0_37] : memref<1x4x8x8xbf16, #tpu.memory_space<vmem>>, vector<1x1x8x8xbf16>
    %63 = vector.shape_cast %62 : vector<1x1x8x8xbf16> to vector<8x8xbf16>
    %64 = vector.shape_cast %61 : vector<8x8xbf16> to vector<1x1x8x8xbf16>
    tpu.vector_store %arg12[%c0_35, %c1, %c0_36, %c0_37], %64 {strides = array<i32>} : memref<1x4x8x8xbf16, #tpu.memory_space<vmem>>, vector<1x1x8x8xbf16>,
    %65 = vector.extract_strided_slice %20 {offsets = [0, 16], sizes = [8, 8], strides = [1, 1]} : vector<8x32xf32> to vector<8x8xf32>
    %66 = arith.mulf %65, %32 : vector<8x8xf32>
    %67 = vector.extract_strided_slice %65 {offsets = [0, 4], sizes = [8, 4], strides = [1, 1]} : vector<8x8xf32> to vector<8x4xf32>
    %cst_38 = arith.constant 0.000000e+00 : f32
    %68 = vector.broadcast %cst_38 : f32 to vector<8x4xf32>
    %69 = arith.subf %68, %67 : vector<8x4xf32>
    %70 = vector.extract_strided_slice %65 {offsets = [0, 0], sizes = [8, 4], strides = [1, 1]} : vector<8x8xf32> to vector<8x4xf32>
    %71 = tpu.concatenate %69, %70 in 1 : vector<8x4xf32>, vector<8x4xf32> -> vector<8x8xf32>
    %72 = arith.mulf %71, %34 : vector<8x8xf32>
    %73 = arith.addf %66, %72 : vector<8x8xf32>
    %cst_39 = arith.constant 0.353553385 : f32
    %74 = vector.broadcast %cst_39 : f32 to vector<8x8xf32>
    %75 = arith.mulf %73, %74 : vector<8x8xf32>
    %76 = arith.truncf %75 : vector<8x8xf32> to vector<8x8xbf16>
    %c0_40 = arith.constant 0 : index
    %c2 = arith.constant 2 : index
    %c0_41 = arith.constant 0 : index
    %c0_42 = arith.constant 0 : index
    %77 = vector.load %arg12[%c0_40, %c2, %c0_41, %c0_42] : memref<1x4x8x8xbf16, #tpu.memory_space<vmem>>, vector<1x1x8x8xbf16>
    %78 = vector.shape_cast %77 : vector<1x1x8x8xbf16> to vector<8x8xbf16>
    %79 = vector.shape_cast %76 : vector<8x8xbf16> to vector<1x1x8x8xbf16>
    tpu.vector_store %arg12[%c0_40, %c2, %c0_41, %c0_42], %79 {strides = array<i32>} : memref<1x4x8x8xbf16, #tpu.memory_space<vmem>>, vector<1x1x8x8xbf16>,
    %80 = vector.extract_strided_slice %20 {offsets = [0, 24], sizes = [8, 8], strides = [1, 1]} : vector<8x32xf32> to vector<8x8xf32>
    %81 = arith.mulf %80, %32 : vector<8x8xf32>
    %82 = vector.extract_strided_slice %80 {offsets = [0, 4], sizes = [8, 4], strides = [1, 1]} : vector<8x8xf32> to vector<8x4xf32>
    %cst_43 = arith.constant 0.000000e+00 : f32
    %83 = vector.broadcast %cst_43 : f32 to vector<8x4xf32>
    %84 = arith.subf %83, %82 : vector<8x4xf32>
    %85 = vector.extract_strided_slice %80 {offsets = [0, 0], sizes = [8, 4], strides = [1, 1]} : vector<8x8xf32> to vector<8x4xf32>
    %86 = tpu.concatenate %84, %85 in 1 : vector<8x4xf32>, vector<8x4xf32> -> vector<8x8xf32>
    %87 = arith.mulf %86, %34 : vector<8x8xf32>
    %88 = arith.addf %81, %87 : vector<8x8xf32>
    %cst_44 = arith.constant 0.353553385 : f32
    %89 = vector.broadcast %cst_44 : f32 to vector<8x8xf32>
    %90 = arith.mulf %88, %89 : vector<8x8xf32>
    %91 = arith.truncf %90 : vector<8x8xf32> to vector<8x8xbf16>
    %c0_45 = arith.constant 0 : index
    %c3 = arith.constant 3 : index
    %c0_46 = arith.constant 0 : index
    %c0_47 = arith.constant 0 : index
    %92 = vector.load %arg12[%c0_45, %c3, %c0_46, %c0_47] : memref<1x4x8x8xbf16, #tpu.memory_space<vmem>>, vector<1x1x8x8xbf16>
    %93 = vector.shape_cast %92 : vector<1x1x8x8xbf16> to vector<8x8xbf16>
    %94 = vector.shape_cast %91 : vector<8x8xbf16> to vector<1x1x8x8xbf16>
    tpu.vector_store %arg12[%c0_45, %c3, %c0_46, %c0_47], %94 {strides = array<i32>} : memref<1x4x8x8xbf16, #tpu.memory_space<vmem>>, vector<1x1x8x8xbf16>,
    %95 = vector.extract_strided_slice %25 {offsets = [0, 0], sizes = [8, 8], strides = [1, 1]} : vector<8x16xf32> to vector<8x8xf32>
    %96 = arith.mulf %95, %32 : vector<8x8xf32>
    %97 = vector.extract_strided_slice %95 {offsets = [0, 4], sizes = [8, 4], strides = [1, 1]} : vector<8x8xf32> to vector<8x4xf32>
    %cst_48 = arith.constant 0.000000e+00 : f32
    %98 = vector.broadcast %cst_48 : f32 to vector<8x4xf32>
    %99 = arith.subf %98, %97 : vector<8x4xf32>
    %100 = vector.extract_strided_slice %95 {offsets = [0, 0], sizes = [8, 4], strides = [1, 1]} : vector<8x8xf32> to vector<8x4xf32>
    %101 = tpu.concatenate %99, %100 in 1 : vector<8x4xf32>, vector<8x4xf32> -> vector<8x8xf32>
    %102 = arith.mulf %101, %34 : vector<8x8xf32>
    %103 = arith.addf %96, %102 : vector<8x8xf32>
    %104 = arith.truncf %103 : vector<8x8xf32> to vector<8x8xbf16>
    %c0_49 = arith.constant 0 : index
    %c0_50 = arith.constant 0 : index
    %c0_51 = arith.constant 0 : index
    %c0_52 = arith.constant 0 : index
    %105 = vector.load %arg13[%c0_49, %c0_50, %c0_51, %c0_52] : memref<1x2x8x8xbf16, #tpu.memory_space<vmem>>, vector<1x1x8x8xbf16>
    %106 = vector.shape_cast %105 : vector<1x1x8x8xbf16> to vector<8x8xbf16>
    %107 = vector.shape_cast %104 : vector<8x8xbf16> to vector<1x1x8x8xbf16>
    tpu.vector_store %arg13[%c0_49, %c0_50, %c0_51, %c0_52], %107 {strides = array<i32>} : memref<1x2x8x8xbf16, #tpu.memory_space<vmem>>, vector<1x1x8x8xbf16>,
    %108 = vector.extract_strided_slice %30 {offsets = [0, 0], sizes = [8, 8], strides = [1, 1]} : vector<8x16xf32> to vector<8x8xf32>
    %109 = arith.truncf %108 : vector<8x8xf32> to vector<8x8xbf16>
    %c0_53 = arith.constant 0 : index
    %c0_54 = arith.constant 0 : index
    %c0_55 = arith.constant 0 : index
    %c0_56 = arith.constant 0 : index
    %110 = vector.load %arg14[%c0_53, %c0_54, %c0_55, %c0_56] : memref<1x2x8x8xbf16, #tpu.memory_space<vmem>>, vector<1x1x8x8xbf16>
    %111 = vector.shape_cast %110 : vector<1x1x8x8xbf16> to vector<8x8xbf16>
    %112 = vector.shape_cast %109 : vector<8x8xbf16> to vector<1x1x8x8xbf16>
    tpu.vector_store %arg14[%c0_53, %c0_54, %c0_55, %c0_56], %112 {strides = array<i32>} : memref<1x2x8x8xbf16, #tpu.memory_space<vmem>>, vector<1x1x8x8xbf16>,
    %113 = vector.extract_strided_slice %25 {offsets = [0, 8], sizes = [8, 8], strides = [1, 1]} : vector<8x16xf32> to vector<8x8xf32>
    %114 = arith.mulf %113, %32 : vector<8x8xf32>
    %115 = vector.extract_strided_slice %113 {offsets = [0, 4], sizes = [8, 4], strides = [1, 1]} : vector<8x8xf32> to vector<8x4xf32>
    %cst_57 = arith.constant 0.000000e+00 : f32
    %116 = vector.broadcast %cst_57 : f32 to vector<8x4xf32>
    %117 = arith.subf %116, %115 : vector<8x4xf32>
    %118 = vector.extract_strided_slice %113 {offsets = [0, 0], sizes = [8, 4], strides = [1, 1]} : vector<8x8xf32> to vector<8x4xf32>
    %119 = tpu.concatenate %117, %118 in 1 : vector<8x4xf32>, vector<8x4xf32> -> vector<8x8xf32>
    %120 = arith.mulf %119, %34 : vector<8x8xf32>
    %121 = arith.addf %114, %120 : vector<8x8xf32>
    %122 = arith.truncf %121 : vector<8x8xf32> to vector<8x8xbf16>
    %c0_58 = arith.constant 0 : index
    %c1_59 = arith.constant 1 : index
    %c0_60 = arith.constant 0 : index
    %c0_61 = arith.constant 0 : index
    %123 = vector.load %arg13[%c0_58, %c1_59, %c0_60, %c0_61] : memref<1x2x8x8xbf16, #tpu.memory_space<vmem>>, vector<1x1x8x8xbf16>
    %124 = vector.shape_cast %123 : vector<1x1x8x8xbf16> to vector<8x8xbf16>
    %125 = vector.shape_cast %122 : vector<8x8xbf16> to vector<1x1x8x8xbf16>
    tpu.vector_store %arg13[%c0_58, %c1_59, %c0_60, %c0_61], %125 {strides = array<i32>} : memref<1x2x8x8xbf16, #tpu.memory_space<vmem>>, vector<1x1x8x8xbf16>,
    %126 = vector.extract_strided_slice %30 {offsets = [0, 8], sizes = [8, 8], strides = [1, 1]} : vector<8x16xf32> to vector<8x8xf32>
    %127 = arith.truncf %126 : vector<8x8xf32> to vector<8x8xbf16>
    %c0_62 = arith.constant 0 : index
    %c1_63 = arith.constant 1 : index
    %c0_64 = arith.constant 0 : index
    %c0_65 = arith.constant 0 : index
    %128 = vector.load %arg14[%c0_62, %c1_63, %c0_64, %c0_65] : memref<1x2x8x8xbf16, #tpu.memory_space<vmem>>, vector<1x1x8x8xbf16>
    %129 = vector.shape_cast %128 : vector<1x1x8x8xbf16> to vector<8x8xbf16>
    %130 = vector.shape_cast %127 : vector<8x8xbf16> to vector<1x1x8x8xbf16>
    tpu.vector_store %arg14[%c0_62, %c1_63, %c0_64, %c0_65], %130 {strides = array<i32>} : memref<1x2x8x8xbf16, #tpu.memory_space<vmem>>, vector<1x1x8x8xbf16>,
    return
  }
  func.func @transform_0(%arg0: i32, %arg1: i32) -> (i32, i32, i32) {
    %c0_i32 = arith.constant 0 : i32
    %c0_i32_0 = arith.constant 0 : i32
    return %arg0, %arg1, %c0_i32 : i32, i32, i32
  }
  func.func @transform_1(%arg0: i32, %arg1: i32) -> (i32, i32, i32) {
    %c0_i32 = arith.constant 0 : i32
    %c0_i32_0 = arith.constant 0 : i32
    return %arg0, %arg1, %c0_i32 : i32, i32, i32
  }
  func.func @transform_2(%arg0: i32, %arg1: i32) -> (i32, i32, i32) {
    %c0_i32 = arith.constant 0 : i32
    %c0_i32_0 = arith.constant 0 : i32
    return %arg0, %arg1, %c0_i32 : i32, i32, i32
  }
  func.func @transform_3(%arg0: i32, %arg1: i32) -> (i32, i32) {
    %c0_i32 = arith.constant 0 : i32
    %c0_i32_0 = arith.constant 0 : i32
    %c0_i32_1 = arith.constant 0 : i32
    return %c0_i32, %c0_i32_0 : i32, i32
  }
  func.func @transform_4(%arg0: i32, %arg1: i32) -> (i32, i32) {
    %c0_i32 = arith.constant 0 : i32
    %c0_i32_0 = arith.constant 0 : i32
    %c0_i32_1 = arith.constant 0 : i32
    return %c0_i32, %c0_i32_0 : i32, i32
  }
  func.func @transform_5(%arg0: i32, %arg1: i32) -> (i32, i32) {
    %c0_i32 = arith.constant 0 : i32
    %c0_i32_0 = arith.constant 0 : i32
    %c0_i32_1 = arith.constant 0 : i32
    return %c0_i32, %c0_i32_0 : i32, i32
  }
  func.func @transform_6(%arg0: i32, %arg1: i32) -> (i32, i32) {
    %c0_i32 = arith.constant 0 : i32
    %c0_i32_0 = arith.constant 0 : i32
    %c0_i32_1 = arith.constant 0 : i32
    return %c0_i32, %c0_i32_0 : i32, i32
  }
  func.func @transform_7(%arg0: i32, %arg1: i32) -> (i32, i32) {
    %c0_i32 = arith.constant 0 : i32
    %c0_i32_0 = arith.constant 0 : i32
    %c0_i32_1 = arith.constant 0 : i32
    return %c0_i32, %c0_i32_0 : i32, i32
  }
  func.func @transform_8(%arg0: i32, %arg1: i32) -> (i32, i32) {
    %c0_i32 = arith.constant 0 : i32
    %c0_i32_0 = arith.constant 0 : i32
    %c0_i32_1 = arith.constant 0 : i32
    return %c0_i32, %c0_i32_0 : i32, i32
  }
  func.func @transform_9(%arg0: i32, %arg1: i32) -> (i32, i32) {
    %c0_i32 = arith.constant 0 : i32
    %c0_i32_0 = arith.constant 0 : i32
    %c0_i32_1 = arith.constant 0 : i32
    return %c0_i32, %c0_i32_0 : i32, i32
  }
  func.func @transform_10(%arg0: i32, %arg1: i32) -> (i32, i32, i32, i32) {
    %c0_i32 = arith.constant 0 : i32
    %c0_i32_0 = arith.constant 0 : i32
    %c0_i32_1 = arith.constant 0 : i32
    return %arg0, %c0_i32, %arg1, %c0_i32_0 : i32, i32, i32, i32
  }
  func.func @transform_11(%arg0: i32, %arg1: i32) -> (i32, i32, i32, i32) {
    %c0_i32 = arith.constant 0 : i32
    %c0_i32_0 = arith.constant 0 : i32
    %c0_i32_1 = arith.constant 0 : i32
    return %arg0, %c0_i32, %arg1, %c0_i32_0 : i32, i32, i32, i32
  }
  func.func @transform_12(%arg0: i32, %arg1: i32) -> (i32, i32, i32, i32) {
    %c0_i32 = arith.constant 0 : i32
    %c0_i32_0 = arith.constant 0 : i32
    %c0_i32_1 = arith.constant 0 : i32
    return %arg0, %c0_i32, %arg1, %c0_i32_0 : i32, i32, i32, i32
  }
}

</mosaic_0001>

<llo_original>
// kernel: tpu_custom_call.1
$region0: #{tpu_custom_call.1}
  #allocation0 [shape = 'u32[]', space=smem, size = 0x4, offset = 0x4, fixed_abs, tag = 'smem constant byte address 0x4 - core index']
  #allocation1 [shape = 'u32[144,128]{1,0:T(1,128)}', space=vmem, size = 0x12000, scoped, tag = 'internal scratch']
  %s0 = inlined_call_operand.hbm [shape: f32[2,8,32], index: 0, kind: input, shape index: {}]
  %s1 = inlined_call_operand.hbm [shape: f32[2,8,8], index: 1, kind: input, shape index: {}]
  %s2 = inlined_call_operand.hbm [shape: f32[2,8,8], index: 2, kind: input, shape index: {}]
  %s3 = inlined_call_operand.hbm [shape: f32[1,32], index: 3, kind: input, shape index: {}]
  %s4 = inlined_call_operand.hbm [shape: bf16[32,32], index: 4, kind: input, shape index: {}]
  %s5 = inlined_call_operand.hbm [shape: f32[1,32], index: 5, kind: input, shape index: {}]
  %s6 = inlined_call_operand.hbm [shape: bf16[32,16], index: 6, kind: input, shape index: {}]
  %s7 = inlined_call_operand.hbm [shape: f32[1,16], index: 7, kind: input, shape index: {}]
  %s8 = inlined_call_operand.hbm [shape: bf16[32,16], index: 8, kind: input, shape index: {}]
  %s9 = inlined_call_operand.hbm [shape: f32[1,16], index: 9, kind: input, shape index: {}]
  %s10 = inlined_call_operand.hbm [shape: bf16[2,4,8,8], index: 10, kind: output, shape index: {0}]
  %s11 = inlined_call_operand.hbm [shape: bf16[2,2,8,8], index: 11, kind: output, shape index: {1}]
  %s12 = inlined_call_operand.hbm [shape: bf16[2,2,8,8], index: 12, kind: output, shape index: {2}]
  %13 = xla_tuple %s10, %s11, %s12
  %s14 = sld [smem:[#allocation0]]
  $region129: #{tpu_custom_call.1} parent=0
    _
  %s16 = ssub.s32 1, %s14
  %s17 = scalar_select 0, %s16, %s14
  $region1: #{tpu_custom_call.1} parent=0
    #allocation2 [shape = 'u8[8192]{0}', space=vmem, size = 0x2000, scoped, tag = 'input window, operand 0']
    #allocation3 [shape = 's32[2]{0}', space=sflag, size = 0x8, scoped, tag = 'scoped memory for tpu_custom_call.1']
    #allocation4 [shape = 's32[2]{0}', space=sflag, size = 0x8, scoped, tag = 'scoped memory for tpu_custom_call.1']
    #allocation5 [shape = 'u8[8192]{0}', space=vmem, size = 0x2000, scoped, tag = 'input window, operand 1']
    #allocation6 [shape = 's32[2]{0}', space=sflag, size = 0x8, scoped, tag = 'scoped memory for tpu_custom_call.1']
    #allocation7 [shape = 'u8[8192]{0}', space=vmem, size = 0x2000, scoped, tag = 'input window, operand 2']
    #allocation8 [shape = 'u8[512]{0}', space=vmem, size = 0x400, scoped, tag = 'input window, operand 3, single buffered']
    #allocation9 [shape = 's32[1]{0}', space=sflag, size = 0x4, scoped, tag = 'scoped memory for tpu_custom_call.1']
    #allocation10 [shape = 'u8[8192]{0}', space=vmem, size = 0x2000, scoped, tag = 'input window, operand 4, single buffered']
    #allocation11 [shape = 'u8[512]{0}', space=vmem, size = 0x400, scoped, tag = 'input window, operand 5, single buffered']
    #allocation12 [shape = 's32[1]{0}', space=sflag, size = 0x4, scoped, tag = 'scoped memory for tpu_custom_call.1']
    #allocation13 [shape = 'u8[8192]{0}', space=vmem, size = 0x2000, scoped, tag = 'input window, operand 6, single buffered']
    #allocation14 [shape = 'u8[512]{0}', space=vmem, size = 0x400, scoped, tag = 'input window, operand 7, single buffered']
    #allocation15 [shape = 's32[1]{0}', space=sflag, size = 0x4, scoped, tag = 'scoped memory for tpu_custom_call.1']
    #allocation16 [shape = 'u8[8192]{0}', space=vmem, size = 0x2000, scoped, tag = 'input window, operand 8, single buffered']
    #allocation17 [shape = 'u8[512]{0}', space=vmem, size = 0x400, scoped, tag = 'input window, operand 9, single buffered']
    #allocation18 [shape = 's32[1]{0}', space=sflag, size = 0x4, scoped, tag = 'scoped memory for tpu_custom_call.1']
    #allocation19 [shape = 'u8[16384]{0}', space=vmem, size = 0x4000, scoped, tag = 'output window, operand 0']
    #allocation20 [shape = 'u8[8192]{0}', space=vmem, size = 0x2000, scoped, tag = 'output window, operand 1']
    #allocation21 [shape = 's32[2]{0}', space=sflag, size = 0x8, scoped, tag = 'scoped memory for tpu_custom_call.1']
    #allocation22 [shape = 'u8[8192]{0}', space=vmem, size = 0x2000, scoped, tag = 'output window, operand 2']
    %18 = vsyncpa [#allocation3], 0
    %s19 = scalar_lea.sflag [#allocation3], 1
    %20 = vsyncpa %s19, 0
    %21 = vsyncpa [#allocation6], 0
    %s22 = scalar_lea.sflag [#allocation6], 1
    %23 = vsyncpa %s22, 0
    %24 = vsyncpa [#allocation9], 0
    %25 = vsyncpa [#allocation12], 0
    %26 = vsyncpa [#allocation15], 0
    %27 = vsyncpa [#allocation18], 0
    %28 = vsyncpa [#allocation4], 0
    %s29 = scalar_lea.sflag [#allocation4], 1
    %30 = vsyncpa %s29, 0
    %31 = vsyncpa [#allocation21], 0
    %s32 = scalar_lea.sflag [#allocation21], 1
    %33 = vsyncpa %s32, 0
    loop: start=0, step=1, limit=4
    $region2: #{tpu_custom_call.1} parent=1 // loop_pre_header
      _
    $region3: #{tpu_custom_call.1} parent=1 // loop_header
      %s35 = sphi 0, %s39
      %p36 = scmp.ge.s32.totalorder %s35, 4
      %s42 = sphi 0, %s54
      %s43 = sphi 0, %s50
      %s44 = sphi 0, %s42
      %s45 = sphi 0, %s43
      %s46 = sphi 0, %s44
      %s47 = sphi 0, %s45
      %s59 = sphi 0, %s61
      %s62 = sphi 0, %s59
      %s63 = sphi 0, %s62
      %s79 = sphi 0, %s63
      %s87 = sphi 0, %s89
      %s90 = sphi 0, %s87
      %s91 = sphi 0, %s90
      %s107 = sphi 0, %s91
      %s115 = sphi 0, %s117
      %s118 = sphi 0, %s115
      %s119 = sphi 0, %s118
      %s135 = sphi 0, %s119
      %s139 = sphi 0, %s139
      %s141 = sphi 0, %s139
      %s142 = sphi 0, %s141
      %s156 = sphi 0, %s142
      %s160 = sphi 0, %s160
      %s162 = sphi 0, %s160
      %s163 = sphi 0, %s162
      %s177 = sphi 0, %s163
      %s181 = sphi 0, %s181
      %s183 = sphi 0, %s181
      %s184 = sphi 0, %s183
      %s198 = sphi 0, %s184
      %s202 = sphi 0, %s202
      %s204 = sphi 0, %s202
      %s205 = sphi 0, %s204
      %s219 = sphi 0, %s205
      %s223 = sphi 0, %s223
      %s225 = sphi 0, %s223
      %s226 = sphi 0, %s225
      %s240 = sphi 0, %s226
      %s244 = sphi 0, %s244
      %s246 = sphi 0, %s244
      %s247 = sphi 0, %s246
      %s261 = sphi 0, %s247
      %s265 = sphi 0, %s265
      %s267 = sphi 0, %s265
      %s268 = sphi 0, %s267
      %s282 = sphi 0, %s268
      %s290 = sphi 0, %s292
      %s293 = sphi 0, %s290
      %s294 = sphi 0, %s293
      %s310 = sphi 0, %s294
      %s318 = sphi 0, %s320
      %s321 = sphi 0, %s318
      %s322 = sphi 0, %s321
      %s338 = sphi 0, %s322
      %s346 = sphi 0, %s348
      %s349 = sphi 0, %s346
      %s350 = sphi 0, %s349
      %s366 = sphi 0, %s350
    $region4: #{tpu_custom_call.1} parent=1 // loop_header_branch
      %38 = sbr.rel (%p36) target = $region8
    $region5: #{tpu_custom_call.1} parent=1 // loop_body
      %s40 = ssub.s32 %s35, 1
      %s41 = ssub.s32 %s35, 2
      %s48 = sadd.s32 1, %s43
      %p49 = scmp.ge.s32.totalorder %s48, 1
      %s50 = scalar_select %p49, 0, %s48
      %s51 = sadd.s32 1, %s42
      %s52 = scalar_select %p49, %s51, %s42
      %p53 = scmp.ge.s32.totalorder %s52, 2
      %s54 = scalar_select %p53, 0, %s52
      %s55 = ssub.s32 %s42, %s54
      %s56 = ssub.s32 %s43, %s50
      %s57 = sor.u32 %s55, %s56
      %p58 = scmp.eq.s32.totalorder %s57, 0
      %s60 = sadd.s32 %s59, 1
      %s61 = scalar_select %p58, %s59, %s60
      %p64 = pneg %p58
      %p65 = scmp.eq.s32.totalorder %s35, 1
      %p66 = por %p64, %p65
      %p67 = scmp.ne.s32.totalorder %s59, %s62
      %p68 = scmp.eq.s32.totalorder %s35, 0
      %p69 = por %p67, %p68
      %p70 = scmp.ne.s32.totalorder %s59, %s62
      %p71 = scmp.eq.s32.totalorder %s40, 1
      %p72 = por %p70, %p71
      %p73 = scmp.ne.s32.totalorder %s62, %s63
      %p74 = scmp.eq.s32.totalorder %s40, 0
      %p75 = por %p73, %p74
      %p76 = scmp.ne.s32.totalorder %s62, %s63
      %p77 = scmp.eq.s32.totalorder %s41, 1
      %p78 = por %p76, %p77
      %p80 = scmp.ne.s32.totalorder %s63, %s79
      %p81 = scmp.eq.s32.totalorder %s41, 0
      %p82 = por %p80, %p81
      %s83 = ssub.s32 %s42, %s54
      %s84 = ssub.s32 %s43, %s50
      %s85 = sor.u32 %s83, %s84
      %p86 = scmp.eq.s32.totalorder %s85, 0
      %s88 = sadd.s32 %s87, 1
      %s89 = scalar_select %p86, %s87, %s88
      %p92 = pneg %p86
      %p93 = scmp.eq.s32.totalorder %s35, 1
      %p94 = por %p92, %p93
      %p95 = scmp.ne.s32.totalorder %s87, %s90
      %p96 = scmp.eq.s32.totalorder %s35, 0
      %p97 = por %p95, %p96
      %p98 = scmp.ne.s32.totalorder %s87, %s90
      %p99 = scmp.eq.s32.totalorder %s40, 1
      %p100 = por %p98, %p99
      %p101 = scmp.ne.s32.totalorder %s90, %s91
      %p102 = scmp.eq.s32.totalorder %s40, 0
      %p103 = por %p101, %p102
      %p104 = scmp.ne.s32.totalorder %s90, %s91
      %p105 = scmp.eq.s32.totalorder %s41, 1
      %p106 = por %p104, %p105
      %p108 = scmp.ne.s32.totalorder %s91, %s107
      %p109 = scmp.eq.s32.totalorder %s41, 0
      %p110 = por %p108, %p109
      %s111 = ssub.s32 %s42, %s54
      %s112 = ssub.s32 %s43, %s50
      %s113 = sor.u32 %s111, %s112
      %p114 = scmp.eq.s32.totalorder %s113, 0
      %s116 = sadd.s32 %s115, 1
      %s117 = scalar_select %p114, %s115, %s116
      %p120 = pneg %p114
      %p121 = scmp.eq.s32.totalorder %s35, 1
      %p122 = por %p120, %p121
      %p123 = scmp.ne.s32.totalorder %s115, %s118
      %p124 = scmp.eq.s32.totalorder %s35, 0
      %p125 = por %p123, %p124
      %p126 = scmp.ne.s32.totalorder %s115, %s118
      %p127 = scmp.eq.s32.totalorder %s40, 1
      %p128 = por %p126, %p127
      %p129 = scmp.ne.s32.totalorder %s118, %s119
      %p130 = scmp.eq.s32.totalorder %s40, 0
      %p131 = por %p129, %p130
      %p132 = scmp.ne.s32.totalorder %s118, %s119
      %p133 = scmp.eq.s32.totalorder %s41, 1
      %p134 = por %p132, %p133
      %p136 = scmp.ne.s32.totalorder %s119, %s135
      %p137 = scmp.eq.s32.totalorder %s41, 0
      %p138 = por %p136, %p137
      %s140 = sadd.s32 %s139, 1
      %p143 = scmp.eq.s32.totalorder %s35, 1
      %p144 = scmp.ne.s32.totalorder %s139, %s141
      %p145 = scmp.eq.s32.totalorder %s35, 0
      %p146 = por %p144, %p145
      %p147 = scmp.ne.s32.totalorder %s139, %s141
      %p148 = scmp.eq.s32.totalorder %s40, 1
      %p149 = por %p147, %p148
      %p150 = scmp.ne.s32.totalorder %s141, %s142
      %p151 = scmp.eq.s32.totalorder %s40, 0
      %p152 = por %p150, %p151
      %p153 = scmp.ne.s32.totalorder %s141, %s142
      %p154 = scmp.eq.s32.totalorder %s41, 1
      %p155 = por %p153, %p154
      %p157 = scmp.ne.s32.totalorder %s142, %s156
      %p158 = scmp.eq.s32.totalorder %s41, 0
      %p159 = por %p157, %p158
      %s161 = sadd.s32 %s160, 1
      %p164 = scmp.eq.s32.totalorder %s35, 1
      %p165 = scmp.ne.s32.totalorder %s160, %s162
      %p166 = scmp.eq.s32.totalorder %s35, 0
      %p167 = por %p165, %p166
      %p168 = scmp.ne.s32.totalorder %s160, %s162
      %p169 = scmp.eq.s32.totalorder %s40, 1
      %p170 = por %p168, %p169
      %p171 = scmp.ne.s32.totalorder %s162, %s163
      %p172 = scmp.eq.s32.totalorder %s40, 0
      %p173 = por %p171, %p172
      %p174 = scmp.ne.s32.totalorder %s162, %s163
      %p175 = scmp.eq.s32.totalorder %s41, 1
      %p176 = por %p174, %p175
      %p178 = scmp.ne.s32.totalorder %s163, %s177
      %p179 = scmp.eq.s32.totalorder %s41, 0
      %p180 = por %p178, %p179
      %s182 = sadd.s32 %s181, 1
      %p185 = scmp.eq.s32.totalorder %s35, 1
      %p186 = scmp.ne.s32.totalorder %s181, %s183
      %p187 = scmp.eq.s32.totalorder %s35, 0
      %p188 = por %p186, %p187
      %p189 = scmp.ne.s32.totalorder %s181, %s183
      %p190 = scmp.eq.s32.totalorder %s40, 1
      %p191 = por %p189, %p190
      %p192 = scmp.ne.s32.totalorder %s183, %s184
      %p193 = scmp.eq.s32.totalorder %s40, 0
      %p194 = por %p192, %p193
      %p195 = scmp.ne.s32.totalorder %s183, %s184
      %p196 = scmp.eq.s32.totalorder %s41, 1
      %p197 = por %p195, %p196
      %p199 = scmp.ne.s32.totalorder %s184, %s198
      %p200 = scmp.eq.s32.totalorder %s41, 0
      %p201 = por %p199, %p200
      %s203 = sadd.s32 %s202, 1
      %p206 = scmp.eq.s32.totalorder %s35, 1
      %p207 = scmp.ne.s32.totalorder %s202, %s204
      %p208 = scmp.eq.s32.totalorder %s35, 0
      %p209 = por %p207, %p208
      %p210 = scmp.ne.s32.totalorder %s202, %s204
      %p211 = scmp.eq.s32.totalorder %s40, 1
      %p212 = por %p210, %p211
      %p213 = scmp.ne.s32.totalorder %s204, %s205
      %p214 = scmp.eq.s32.totalorder %s40, 0
      %p215 = por %p213, %p214
      %p216 = scmp.ne.s32.totalorder %s204, %s205
      %p217 = scmp.eq.s32.totalorder %s41, 1
      %p218 = por %p216, %p217
      %p220 = scmp.ne.s32.totalorder %s205, %s219
      %p221 = scmp.eq.s32.totalorder %s41, 0
      %p222 = por %p220, %p221
      %s224 = sadd.s32 %s223, 1
      %p227 = scmp.eq.s32.totalorder %s35, 1
      %p228 = scmp.ne.s32.totalorder %s223, %s225
      %p229 = scmp.eq.s32.totalorder %s35, 0
      %p230 = por %p228, %p229
      %p231 = scmp.ne.s32.totalorder %s223, %s225
      %p232 = scmp.eq.s32.totalorder %s40, 1
      %p233 = por %p231, %p232
      %p234 = scmp.ne.s32.totalorder %s225, %s226
      %p235 = scmp.eq.s32.totalorder %s40, 0
      %p236 = por %p234, %p235
      %p237 = scmp.ne.s32.totalorder %s225, %s226
      %p238 = scmp.eq.s32.totalorder %s41, 1
      %p239 = por %p237, %p238
      %p241 = scmp.ne.s32.totalorder %s226, %s240
      %p242 = scmp.eq.s32.totalorder %s41, 0
      %p243 = por %p241, %p242
      %s245 = sadd.s32 %s244, 1
      %p248 = scmp.eq.s32.totalorder %s35, 1
      %p249 = scmp.ne.s32.totalorder %s244, %s246
      %p250 = scmp.eq.s32.totalorder %s35, 0
      %p251 = por %p249, %p250
      %p252 = scmp.ne.s32.totalorder %s244, %s246
      %p253 = scmp.eq.s32.totalorder %s40, 1
      %p254 = por %p252, %p253
      %p255 = scmp.ne.s32.totalorder %s246, %s247
      %p256 = scmp.eq.s32.totalorder %s40, 0
      %p257 = por %p255, %p256
      %p258 = scmp.ne.s32.totalorder %s246, %s247
      %p259 = scmp.eq.s32.totalorder %s41, 1
      %p260 = por %p258, %p259
      %p262 = scmp.ne.s32.totalorder %s247, %s261
      %p263 = scmp.eq.s32.totalorder %s41, 0
      %p264 = por %p262, %p263
      %s266 = sadd.s32 %s265, 1
      %p269 = scmp.eq.s32.totalorder %s35, 1
      %p270 = scmp.ne.s32.totalorder %s265, %s267
      %p271 = scmp.eq.s32.totalorder %s35, 0
      %p272 = por %p270, %p271
      %p273 = scmp.ne.s32.totalorder %s265, %s267
      %p274 = scmp.eq.s32.totalorder %s40, 1
      %p275 = por %p273, %p274
      %p276 = scmp.ne.s32.totalorder %s267, %s268
      %p277 = scmp.eq.s32.totalorder %s40, 0
      %p278 = por %p276, %p277
      %p279 = scmp.ne.s32.totalorder %s267, %s268
      %p280 = scmp.eq.s32.totalorder %s41, 1
      %p281 = por %p279, %p280
      %p283 = scmp.ne.s32.totalorder %s268, %s282
      %p284 = scmp.eq.s32.totalorder %s41, 0
      %p285 = por %p283, %p284
      %s286 = ssub.s32 %s42, %s54
      %s287 = ssub.s32 %s43, %s50
      %s288 = sor.u32 %s286, %s287
      %p289 = scmp.eq.s32.totalorder %s288, 0
      %s291 = sadd.s32 %s290, 1
      %s292 = scalar_select %p289, %s290, %s291
      %p295 = pneg %p289
      %p296 = scmp.eq.s32.totalorder %s35, 1
      %p297 = por %p295, %p296
      %p298 = scmp.ne.s32.totalorder %s290, %s293
      %p299 = scmp.eq.s32.totalorder %s35, 0
      %p300 = por %p298, %p299
      %p301 = scmp.ne.s32.totalorder %s290, %s293
      %p302 = scmp.eq.s32.totalorder %s40, 1
      %p303 = por %p301, %p302
      %p304 = scmp.ne.s32.totalorder %s293, %s294
      %p305 = scmp.eq.s32.totalorder %s40, 0
      %p306 = por %p304, %p305
      %p307 = scmp.ne.s32.totalorder %s293, %s294
      %p308 = scmp.eq.s32.totalorder %s41, 1
      %p309 = por %p307, %p308
      %p311 = scmp.ne.s32.totalorder %s294, %s310
      %p312 = scmp.eq.s32.totalorder %s41, 0
      %p313 = por %p311, %p312
      %s314 = ssub.s32 %s42, %s54
      %s315 = ssub.s32 %s43, %s50
      %s316 = sor.u32 %s314, %s315
      %p317 = scmp.eq.s32.totalorder %s316, 0
      %s319 = sadd.s32 %s318, 1
      %s320 = scalar_select %p317, %s318, %s319
      %p323 = pneg %p317
      %p324 = scmp.eq.s32.totalorder %s35, 1
      %p325 = por %p323, %p324
      %p326 = scmp.ne.s32.totalorder %s318, %s321
      %p327 = scmp.eq.s32.totalorder %s35, 0
      %p328 = por %p326, %p327
      %p329 = scmp.ne.s32.totalorder %s318, %s321
      %p330 = scmp.eq.s32.totalorder %s40, 1
      %p331 = por %p329, %p330
      %p332 = scmp.ne.s32.totalorder %s321, %s322
      %p333 = scmp.eq.s32.totalorder %s40, 0
      %p334 = por %p332, %p333
      %p335 = scmp.ne.s32.totalorder %s321, %s322
      %p336 = scmp.eq.s32.totalorder %s41, 1
      %p337 = por %p335, %p336
      %p339 = scmp.ne.s32.totalorder %s322, %s338
      %p340 = scmp.eq.s32.totalorder %s41, 0
      %p341 = por %p339, %p340
      %s342 = ssub.s32 %s42, %s54
      %s343 = ssub.s32 %s43, %s50
      %s344 = sor.u32 %s342, %s343
      %p345 = scmp.eq.s32.totalorder %s344, 0
      %s347 = sadd.s32 %s346, 1
      %s348 = scalar_select %p345, %s346, %s347
      %p351 = pneg %p345
      %p352 = scmp.eq.s32.totalorder %s35, 1
      %p353 = por %p351, %p352
      %p354 = scmp.ne.s32.totalorder %s346, %s349
      %p355 = scmp.eq.s32.totalorder %s35, 0
      %p356 = por %p354, %p355
      %p357 = scmp.ne.s32.totalorder %s346, %s349
      %p358 = scmp.eq.s32.totalorder %s40, 1
      %p359 = por %p357, %p358
      %p360 = scmp.ne.s32.totalorder %s349, %s350
      %p361 = scmp.eq.s32.totalorder %s40, 0
      %p362 = por %p360, %p361
      %p363 = scmp.ne.s32.totalorder %s349, %s350
      %p364 = scmp.eq.s32.totalorder %s41, 1
      %p365 = por %p363, %p364
      %p367 = scmp.ne.s32.totalorder %s350, %s366
      %p368 = scmp.eq.s32.totalorder %s41, 0
      %p369 = por %p367, %p368
      %p370 = scmp.le.s32.totalorder 1, %s35
      %p371 = scmp.lt.s32.totalorder %s35, 3
      %p372 = pnand %p370, %p371
      %p373 = pneg %p372
      // Predicated region
      $region9: #{tpu_custom_call.1} parent=5 // pred_check
        _
      $region10: #{tpu_custom_call.1} parent=5 // pred_check_branch
        %375 = sbr.rel (%p372) target = $region12
      $region11: #{tpu_custom_call.1} parent=5 // pred_region
        %s376 = ssub.s32 %s35, 1
        // Predicated region
        $region13: #{tpu_custom_call.1} parent=11 // pred_check
          %p377 = pneg %p152
        $region14: #{tpu_custom_call.1} parent=11 // pred_check_branch
          %379 = sbr.rel (%p377) target = $region16
        $region15: #{tpu_custom_call.1} parent=11 // pred_region
          %s381 = ssub.s32 16, 16
          %382 = vsyncadd [#allocation9], %s381
          %s384 = sshll.u32 [#allocation8], 4
          %s385 = int_to_ptr.vmem [resolvable:$true] %s384
          %387 = dma.hbm_to_vmem [thread:$0]  %s3, 16, %s385, [#allocation9]
        $region16: #{tpu_custom_call.1} parent=11 // pred_fallthru
          _
        // Predicated region
        $region17: #{tpu_custom_call.1} parent=11 // pred_check
          %p388 = pneg %p173
        $region18: #{tpu_custom_call.1} parent=11 // pred_check_branch
          %390 = sbr.rel (%p388) target = $region20
        $region19: #{tpu_custom_call.1} parent=11 // pred_region
          %s392 = ssub.s32 256, 256
          %393 = vsyncadd [#allocation9], %s392
          %s394 = sshll.u32 [#allocation10], 4
          %s395 = int_to_ptr.vmem [resolvable:$true] %s394
          %400 = dma.hbm_to_vmem [thread:$0]  %s4, 256, %s395, [#allocation9], 64, 64, 4
        $region20: #{tpu_custom_call.1} parent=11 // pred_fallthru
          _
        // Predicated region
        $region21: #{tpu_custom_call.1} parent=11 // pred_check
          %p401 = pneg %p194
        $region22: #{tpu_custom_call.1} parent=11 // pred_check_branch
          %403 = sbr.rel (%p401) target = $region24
        $region23: #{tpu_custom_call.1} parent=11 // pred_region
          %s405 = ssub.s32 16, 16
          %406 = vsyncadd [#allocation12], %s405
          %s408 = sshll.u32 [#allocation11], 4
          %s409 = int_to_ptr.vmem [resolvable:$true] %s408
          %411 = dma.hbm_to_vmem [thread:$0]  %s5, 16, %s409, [#allocation12]
        $region24: #{tpu_custom_call.1} parent=11 // pred_fallthru
          _
        // Predicated region
        $region25: #{tpu_custom_call.1} parent=11 // pred_check
          %p412 = pneg %p215
        $region26: #{tpu_custom_call.1} parent=11 // pred_check_branch
          %414 = sbr.rel (%p412) target = $region28
        $region27: #{tpu_custom_call.1} parent=11 // pred_region
          %s416 = ssub.s32 256, 256
          %417 = vsyncadd [#allocation12], %s416
          %s418 = sshll.u32 [#allocation13], 4
          %s419 = int_to_ptr.vmem [resolvable:$true] %s418
          %424 = dma.hbm_to_vmem [thread:$0]  %s6, 256, %s419, [#allocation12], 64, 64, 4
        $region28: #{tpu_custom_call.1} parent=11 // pred_fallthru
          _
        // Predicated region
        $region29: #{tpu_custom_call.1} parent=11 // pred_check
          %p425 = pneg %p236
        $region30: #{tpu_custom_call.1} parent=11 // pred_check_branch
          %427 = sbr.rel (%p425) target = $region32
        $region31: #{tpu_custom_call.1} parent=11 // pred_region
          %s429 = ssub.s32 16, 16
          %430 = vsyncadd [#allocation15], %s429
          %s432 = sshll.u32 [#allocation14], 4
          %s433 = int_to_ptr.vmem [resolvable:$true] %s432
          %435 = dma.hbm_to_vmem [thread:$0]  %s7, 16, %s433, [#allocation15]
        $region32: #{tpu_custom_call.1} parent=11 // pred_fallthru
          _
        // Predicated region
        $region33: #{tpu_custom_call.1} parent=11 // pred_check
          %p436 = pneg %p257
        $region34: #{tpu_custom_call.1} parent=11 // pred_check_branch
          %438 = sbr.rel (%p436) target = $region36
        $region35: #{tpu_custom_call.1} parent=11 // pred_region
          %s440 = ssub.s32 256, 256
          %441 = vsyncadd [#allocation15], %s440
          %s442 = sshll.u32 [#allocation16], 4
          %s443 = int_to_ptr.vmem [resolvable:$true] %s442
          %448 = dma.hbm_to_vmem [thread:$0]  %s8, 256, %s443, [#allocation15], 64, 64, 4
        $region36: #{tpu_custom_call.1} parent=11 // pred_fallthru
          _
        // Predicated region
        $region37: #{tpu_custom_call.1} parent=11 // pred_check
          %p449 = pneg %p278
        $region38: #{tpu_custom_call.1} parent=11 // pred_check_branch
          %451 = sbr.rel (%p449) target = $region40
        $region39: #{tpu_custom_call.1} parent=11 // pred_region
          %s453 = ssub.s32 16, 16
          %454 = vsyncadd [#allocation18], %s453
          %s456 = sshll.u32 [#allocation17], 4
          %s457 = int_to_ptr.vmem [resolvable:$true] %s456
          %459 = dma.hbm_to_vmem [thread:$0]  %s9, 16, %s457, [#allocation18]
        $region40: #{tpu_custom_call.1} parent=11 // pred_fallthru
          _
      $region12: #{tpu_custom_call.1} parent=5 // pred_fallthru
        _
      %p460 = scmp.lt.s32.totalorder %s35, 2
      // Predicated region
      $region41: #{tpu_custom_call.1} parent=5 // pred_check
        %p461 = pneg %p460
      $region42: #{tpu_custom_call.1} parent=5 // pred_check_branch
        %463 = sbr.rel (%p461) target = $region44
      $region43: #{tpu_custom_call.1} parent=5 // pred_region
        // Predicated region
        $region45: #{tpu_custom_call.1} parent=43 // pred_check
          %p464 = pneg %p69
        $region46: #{tpu_custom_call.1} parent=43 // pred_check_branch
          %466 = sbr.rel (%p464) target = $region48
        $region47: #{tpu_custom_call.1} parent=43 // pred_region
          %s467 = sand.u32 %s59, 1
          %s468 = scalar_lea.sflag [#allocation3], %s467
          %s469 = sand.u32 %s59, 1
          %s470 = smul.addr %s469, 8
          %s471 = scalar_lea.vmem [#allocation2], %s470
          %s473 = ssub.s32 128, 128
          %474 = vsyncadd %s468, %s473
          %s475 = sadd.s32 %s43, %s42
          %s476 = smul.addr %s475, 128
          %s477 = scalar_lea.hbm %s0, %s476
          %s479 = sshll.u32 %s471, 4
          %s480 = int_to_ptr.vmem [resolvable:$true] %s479
          %482 = dma.hbm_to_vmem [thread:$0]  %s477, 128, %s480, %s468
        $region48: #{tpu_custom_call.1} parent=43 // pred_fallthru
          _
        // Predicated region
        $region49: #{tpu_custom_call.1} parent=43 // pred_check
          %p483 = pneg %p97
        $region50: #{tpu_custom_call.1} parent=43 // pred_check_branch
          %485 = sbr.rel (%p483) target = $region52
        $region51: #{tpu_custom_call.1} parent=43 // pred_region
          %s486 = sand.u32 %s35, 1
          %s487 = scalar_lea.sflag [#allocation6], %s486
          %s488 = sand.u32 %s87, 1
          %s489 = smul.addr %s488, 8
          %s490 = scalar_lea.vmem [#allocation5], %s489
          %s492 = ssub.s32 128, 128
          %493 = vsyncadd %s487, %s492
          %s494 = sadd.s32 %s43, %s42
          %s495 = smul.addr %s494, 128
          %s496 = scalar_lea.hbm %s1, %s495
          %s498 = sshll.u32 %s490, 4
          %s499 = int_to_ptr.vmem [resolvable:$true] %s498
          %501 = dma.hbm_to_vmem [thread:$0]  %s496, 128, %s499, %s487
        $region52: #{tpu_custom_call.1} parent=43 // pred_fallthru
          _
        // Predicated region
        $region53: #{tpu_custom_call.1} parent=43 // pred_check
          %p502 = pneg %p125
        $region54: #{tpu_custom_call.1} parent=43 // pred_check_branch
          %504 = sbr.rel (%p502) target = $region56
        $region55: #{tpu_custom_call.1} parent=43 // pred_region
          %s505 = sand.u32 %s35, 1
          %s506 = scalar_lea.sflag [#allocation6], %s505
          %s507 = sand.u32 %s115, 1
          %s508 = smul.addr %s507, 8
          %s509 = scalar_lea.vmem [#allocation7], %s508
          %s511 = ssub.s32 128, 128
          %512 = vsyncadd %s506, %s511
          %s513 = sadd.s32 %s43, %s42
          %s514 = smul.addr %s513, 128
          %s515 = scalar_lea.hbm %s2, %s514
          %s517 = sshll.u32 %s509, 4
          %s518 = int_to_ptr.vmem [resolvable:$true] %s517
          %520 = dma.hbm_to_vmem [thread:$0]  %s515, 128, %s518, %s506
        $region56: #{tpu_custom_call.1} parent=43 // pred_fallthru
          _
      $region44: #{tpu_custom_call.1} parent=5 // pred_fallthru
        _
      %p521 = scmp.le.s32.totalorder 1, %s35
      %p522 = scmp.lt.s32.totalorder %s35, 3
      %p523 = pnand %p521, %p522
      %p524 = pneg %p523
      // Predicated region
      $region57: #{tpu_custom_call.1} parent=5 // pred_check
        _
      $region58: #{tpu_custom_call.1} parent=5 // pred_check_branch
        %526 = sbr.rel (%p523) target = $region60
      $region59: #{tpu_custom_call.1} parent=5 // pred_region
        %s527 = ssub.s32 %s35, 1
        %s528 = sand.u32 %s62, 1
        %s529 = scalar_lea.sflag [#allocation3], %s528
        %s530 = sand.u32 %s62, 1
        %s531 = smul.addr %s530, 8
        %s532 = scalar_lea.vmem [#allocation2], %s531
        // Predicated region
        $region61: #{tpu_custom_call.1} parent=59 // pred_check
          %p533 = pneg %p75
        $region62: #{tpu_custom_call.1} parent=59 // pred_check_branch
          %535 = sbr.rel (%p533) target = $region64
        $region63: #{tpu_custom_call.1} parent=59 // pred_region
          %536 = dma.done %s529, 128
        $region64: #{tpu_custom_call.1} parent=59 // pred_fallthru
          _
        %s537 = sand.u32 %s40, 1
        %s538 = scalar_lea.sflag [#allocation6], %s537
        %s539 = sand.u32 %s90, 1
        %s540 = smul.addr %s539, 8
        %s541 = scalar_lea.vmem [#allocation5], %s540
        // Predicated region
        $region65: #{tpu_custom_call.1} parent=59 // pred_check
          %p542 = pneg %p103
        $region66: #{tpu_custom_call.1} parent=59 // pred_check_branch
          %544 = sbr.rel (%p542) target = $region68
        $region67: #{tpu_custom_call.1} parent=59 // pred_region
          %545 = dma.done %s538, 128
        $region68: #{tpu_custom_call.1} parent=59 // pred_fallthru
          _
        %s546 = sand.u32 %s40, 1
        %s547 = scalar_lea.sflag [#allocation6], %s546
        %s548 = sand.u32 %s118, 1
        %s549 = smul.addr %s548, 8
        %s550 = scalar_lea.vmem [#allocation7], %s549
        // Predicated region
        $region69: #{tpu_custom_call.1} parent=59 // pred_check
          %p551 = pneg %p131
        $region70: #{tpu_custom_call.1} parent=59 // pred_check_branch
          %553 = sbr.rel (%p551) target = $region72
        $region71: #{tpu_custom_call.1} parent=59 // pred_region
          %554 = dma.done %s547, 128
        $region72: #{tpu_custom_call.1} parent=59 // pred_fallthru
          _
        // Predicated region
        $region73: #{tpu_custom_call.1} parent=59 // pred_check
          %p555 = pneg %p152
        $region74: #{tpu_custom_call.1} parent=59 // pred_check_branch
          %557 = sbr.rel (%p555) target = $region76
        $region75: #{tpu_custom_call.1} parent=59 // pred_region
          %558 = dma.done [#allocation9], 16
        $region76: #{tpu_custom_call.1} parent=59 // pred_fallthru
          _
        // Predicated region
        $region77: #{tpu_custom_call.1} parent=59 // pred_check
          %p559 = pneg %p173
        $region78: #{tpu_custom_call.1} parent=59 // pred_check_branch
          %561 = sbr.rel (%p559) target = $region80
        $region79: #{tpu_custom_call.1} parent=59 // pred_region
          %562 = dma.done [#allocation9], 256
        $region80: #{tpu_custom_call.1} parent=59 // pred_fallthru
          _
        // Predicated region
        $region81: #{tpu_custom_call.1} parent=59 // pred_check
          %p563 = pneg %p194
        $region82: #{tpu_custom_call.1} parent=59 // pred_check_branch
          %565 = sbr.rel (%p563) target = $region84
        $region83: #{tpu_custom_call.1} parent=59 // pred_region
          %566 = dma.done [#allocation12], 16
        $region84: #{tpu_custom_call.1} parent=59 // pred_fallthru
          _
        // Predicated region
        $region85: #{tpu_custom_call.1} parent=59 // pred_check
          %p567 = pneg %p215
        $region86: #{tpu_custom_call.1} parent=59 // pred_check_branch
          %569 = sbr.rel (%p567) target = $region88
        $region87: #{tpu_custom_call.1} parent=59 // pred_region
          %570 = dma.done [#allocation12], 256
        $region88: #{tpu_custom_call.1} parent=59 // pred_fallthru
          _
        // Predicated region
        $region89: #{tpu_custom_call.1} parent=59 // pred_check
          %p571 = pneg %p236
        $region90: #{tpu_custom_call.1} parent=59 // pred_check_branch
          %573 = sbr.rel (%p571) target = $region92
        $region91: #{tpu_custom_call.1} parent=59 // pred_region
          %574 = dma.done [#allocation15], 16
        $region92: #{tpu_custom_call.1} parent=59 // pred_fallthru
          _
        // Predicated region
        $region93: #{tpu_custom_call.1} parent=59 // pred_check
          %p575 = pneg %p257
        $region94: #{tpu_custom_call.1} parent=59 // pred_check_branch
          %577 = sbr.rel (%p575) target = $region96
        $region95: #{tpu_custom_call.1} parent=59 // pred_region
          %578 = dma.done [#allocation15], 256
        $region96: #{tpu_custom_call.1} parent=59 // pred_fallthru
          _
        // Predicated region
        $region97: #{tpu_custom_call.1} parent=59 // pred_check
          %p579 = pneg %p278
        $region98: #{tpu_custom_call.1} parent=59 // pred_check_branch
          %581 = sbr.rel (%p579) target = $region100
        $region99: #{tpu_custom_call.1} parent=59 // pred_region
          %582 = dma.done [#allocation18], 16
        $region100: #{tpu_custom_call.1} parent=59 // pred_fallthru
          _
        %s583 = sand.u32 %s62, 1
        %s584 = scalar_lea.sflag [#allocation3], %s583
        %s585 = sand.u32 %s62, 1
        %s586 = smul.addr %s585, 8
        %s587 = scalar_lea.vmem [#allocation2], %s586
        %p588 = pneg %p75
        %p589 = pneg %p72
        %s590 = sand.u32 %s40, 1
        %s591 = scalar_lea.sflag [#allocation6], %s590
        %s592 = sand.u32 %s90, 1
        %s593 = smul.addr %s592, 8
        %s594 = scalar_lea.vmem [#allocation5], %s593
        %p595 = pneg %p103
        %p596 = pneg %p100
        %s597 = sand.u32 %s40, 1
        %s598 = scalar_lea.sflag [#allocation6], %s597
        %s599 = sand.u32 %s118, 1
        %s600 = smul.addr %s599, 8
        %s601 = scalar_lea.vmem [#allocation7], %s600
        %p602 = pneg %p131
        %p603 = pneg %p128
        %p604 = pneg %p152
        %p605 = pneg %p149
        %p606 = pneg %p173
        %p607 = pneg %p170
        %p608 = pneg %p194
        %p609 = pneg %p191
        %p610 = pneg %p215
        %p611 = pneg %p212
        %p612 = pneg %p236
        %p613 = pneg %p233
        %p614 = pneg %p257
        %p615 = pneg %p254
        %p616 = pneg %p278
        %p617 = pneg %p275
        %p618 = pneg %p306
        %p619 = pneg %p303
        %s620 = sand.u32 %s293, 1
        %s621 = scalar_lea.sflag [#allocation4], %s620
        %s622 = sand.u32 %s293, 1
        %s623 = smul.addr %s622, 16
        %s624 = scalar_lea.vmem [#allocation19], %s623
        %p625 = pneg %p334
        %p626 = pneg %p331
        %s627 = sand.u32 %s40, 1
        %s628 = scalar_lea.sflag [#allocation21], %s627
        %s629 = sand.u32 %s321, 1
        %s630 = smul.addr %s629, 8
        %s631 = scalar_lea.vmem [#allocation20], %s630
        %p632 = pneg %p362
        %p633 = pneg %p359
        %s634 = sand.u32 %s40, 1
        %s635 = scalar_lea.sflag [#allocation21], %s634
        %s636 = sand.u32 %s349, 1
        %s637 = smul.addr %s636, 8
        %s638 = scalar_lea.vmem [#allocation22], %s637
        %v640 = vld [vmem:[%s532] sm:$0xff]
        %v641 = vld [vmem:[#allocation8] sm:$0x1]
        %v642 = vmul.f32 %v640, %v640
        %vm643 = vcmask 261120
        %v644 = vsel %vm643, %v642, 0.0
        %645 = vadd.xlane.f32.xlu0 %v644
        %v646 = vpop.xlane.xlu0 %645
        %v647 = vrcp.pop 32.0
        %v648 = vmul.f32 %v646, %v647
        %v649 = vadd.f32 %v648, 1e-06
        %v650 = vrsqrt.pop %v649
        %v651 = vmul.f32 %v640, %v650
        %v653 = vlaneseq
        %v654 = vshrl.u32 %v653, 7
        %v655 = vsub.s32 0, %v654
        %v656 = vrot.slane %v641, %v655
        %v658 = vmul.f32 %v656, %v651
        %v659 = vpack.c.bf16 %v658, %v658
        %v660 = vld [vmem:[#allocation10] sm:$0xf]
        %v661 = vld [vmem:[#allocation10 + $0x4] sm:$0xf]
        %v662 = vld [vmem:[#allocation10 + $0x8] sm:$0xf]
        %v663 = vld [vmem:[#allocation10 + $0xc] sm:$0xf]
        %v664 = vld [vmem:[#allocation11] sm:$0x1]
        %v666 = vlaneseq
        %v667 = vshrl.u32 %v666, 7
        %v668 = vsub.s32 0, %v667
        %v669 = vrot.slane %v664, %v668
        %v675 = vunpack.c.l.b16 %v660
        %v676 = vunpack.c.l.b16 %v661
        %v677 = vunpack.c.l.b16 %v662
        %v678 = vunpack.c.l.b16 %v663
        %v679 = vpack.c.b16 %v676, %v675
        %v680 = vpack.c.b16 %v678, %v677
        %v684 = vsel %vm643, %v659, 0
        %686 = vmatprep.subr.bf16.mxu0 0
        %687 = vmatpush1.bf16.msra.mxu0 %v679
        %688 = vmatprep.subr.bf16.mxu0 0
        %689 = vmatpush1.bf16.msra.mxu0 %v680
        %690 = vmatprep.subr.bf16.mxu0 0
        %691 = vmatpush1.bf16.msra.mxu0 0
        %692 = vmatprep.subr.bf16.mxu0 0
        %693 = vmatpush1.bf16.msra.mxu0 0
        %694 = vmatprep.subr.bf16.mxu0 0
        %695 = vmatpush1.bf16.msra.mxu0 0
        %696 = vmatprep.subr.bf16.mxu0 0
        %697 = vmatpush1.bf16.msra.mxu0 0
        %698 = vmatprep.subr.bf16.mxu0 0
        %699 = vmatpush1.bf16.msra.mxu0 0
        %700 = vmatprep.subr.bf16.mxu0 0
        %701 = vmatpush1.bf16.msra.mxu0 0
        %702 = vmatprep.subr.bf16.mxu0 0
        %703 = vmatpush1.bf16.msra.mxu0 0
        %704 = vmatprep.subr.bf16.mxu0 0
        %705 = vmatpush1.bf16.msra.mxu0 0
        %706 = vmatprep.subr.bf16.mxu0 0
        %707 = vmatpush1.bf16.msra.mxu0 0
        %708 = vmatprep.subr.bf16.mxu0 0
        %709 = vmatpush1.bf16.msra.mxu0 0
        %710 = vmatprep.subr.bf16.mxu0 0
        %711 = vmatpush1.bf16.msra.mxu0 0
        %712 = vmatprep.subr.bf16.mxu0 0
        %713 = vmatpush1.bf16.msra.mxu0 0
        %714 = vmatprep.subr.bf16.mxu0 0
        %715 = vmatpush1.bf16.msra.mxu0 0
        %716 = vmatprep.subr.bf16.mxu0 0
        %717 = vmatpush1.bf16.msra.mxu0 0
        %718 = vmatprep.mubr.bf16.mxu0 0
        %719 = vmatmul.mubr.bf16.gmra.mrb[0].mxu0 %v684
        %v720 = vpop.f32.mrb[0].mxu0
        %v721 = vadd.f32 %v669, %v720
        %v722 = vpop.f32.mrb[0].mxu0
        %v723 = vpop.f32.mrb[0].mxu0
        %v724 = vpop.f32.mrb[0].mxu0
        %725 = vdwg.mxu0
        %v726 = vld [vmem:[#allocation13] sm:$0xf]
        %v727 = vld [vmem:[#allocation13 + $0x4] sm:$0xf]
        %v728 = vld [vmem:[#allocation13 + $0x8] sm:$0xf]
        %v729 = vld [vmem:[#allocation13 + $0xc] sm:$0xf]
        %v730 = vld [vmem:[#allocation14] sm:$0x1]
        %v732 = vlaneseq
        %v733 = vshrl.u32 %v732, 7
        %v734 = vsub.s32 0, %v733
        %v735 = vrot.slane %v730, %v734
        %v741 = vunpack.c.l.b16 %v726
        %v742 = vunpack.c.l.b16 %v727
        %v743 = vunpack.c.l.b16 %v728
        %v744 = vunpack.c.l.b16 %v729
        %v745 = vpack.c.b16 %v742, %v741
        %v746 = vpack.c.b16 %v744, %v743
        %749 = vmatprep.subr.bf16.mxu0 0
        %750 = vmatpush1.bf16.msra.mxu0 %v745
        %751 = vmatprep.subr.bf16.mxu0 0
        %752 = vmatpush1.bf16.msra.mxu0 %v746
        %753 = vmatprep.subr.bf16.mxu0 0
        %754 = vmatpush1.bf16.msra.mxu0 0
        %755 = vmatprep.subr.bf16.mxu0 0
        %756 = vmatpush1.bf16.msra.mxu0 0
        %757 = vmatprep.subr.bf16.mxu0 0
        %758 = vmatpush1.bf16.msra.mxu0 0
        %759 = vmatprep.subr.bf16.mxu0 0
        %760 = vmatpush1.bf16.msra.mxu0 0
        %761 = vmatprep.subr.bf16.mxu0 0
        %762 = vmatpush1.bf16.msra.mxu0 0
        %763 = vmatprep.subr.bf16.mxu0 0
        %764 = vmatpush1.bf16.msra.mxu0 0
        %765 = vmatprep.subr.bf16.mxu0 0
        %766 = vmatpush1.bf16.msra.mxu0 0
        %767 = vmatprep.subr.bf16.mxu0 0
        %768 = vmatpush1.bf16.msra.mxu0 0
        %769 = vmatprep.subr.bf16.mxu0 0
        %770 = vmatpush1.bf16.msra.mxu0 0
        %771 = vmatprep.subr.bf16.mxu0 0
        %772 = vmatpush1.bf16.msra.mxu0 0
        %773 = vmatprep.subr.bf16.mxu0 0
        %774 = vmatpush1.bf16.msra.mxu0 0
        %775 = vmatprep.subr.bf16.mxu0 0
        %776 = vmatpush1.bf16.msra.mxu0 0
        %777 = vmatprep.subr.bf16.mxu0 0
        %778 = vmatpush1.bf16.msra.mxu0 0
        %779 = vmatprep.subr.bf16.mxu0 0
        %780 = vmatpush1.bf16.msra.mxu0 0
        %781 = vmatprep.mubr.bf16.mxu0 0
        %782 = vmatmul.mubr.bf16.gmra.mrb[0].mxu0 %v684
        %v783 = vpop.f32.mrb[0].mxu0
        %v784 = vadd.f32 %v735, %v783
        %v785 = vpop.f32.mrb[0].mxu0
        %v786 = vpop.f32.mrb[0].mxu0
        %v787 = vpop.f32.mrb[0].mxu0
        %788 = vdwg.mxu0
        %v789 = vld [vmem:[#allocation16] sm:$0xf]
        %v790 = vld [vmem:[#allocation16 + $0x4] sm:$0xf]
        %v791 = vld [vmem:[#allocation16 + $0x8] sm:$0xf]
        %v792 = vld [vmem:[#allocation16 + $0xc] sm:$0xf]
        %v793 = vld [vmem:[#allocation17] sm:$0x1]
        %v795 = vlaneseq
        %v796 = vshrl.u32 %v795, 7
        %v797 = vsub.s32 0, %v796
        %v798 = vrot.slane %v793, %v797
        %v804 = vunpack.c.l.b16 %v789
        %v805 = vunpack.c.l.b16 %v790
        %v806 = vunpack.c.l.b16 %v791
        %v807 = vunpack.c.l.b16 %v792
        %v808 = vpack.c.b16 %v805, %v804
        %v809 = vpack.c.b16 %v807, %v806
        %812 = vmatprep.subr.bf16.mxu0 0
        %813 = vmatpush1.bf16.msra.mxu0 %v808
        %814 = vmatprep.subr.bf16.mxu0 0
        %815 = vmatpush1.bf16.msra.mxu0 %v809
        %816 = vmatprep.subr.bf16.mxu0 0
        %817 = vmatpush1.bf16.msra.mxu0 0
        %818 = vmatprep.subr.bf16.mxu0 0
        %819 = vmatpush1.bf16.msra.mxu0 0
        %820 = vmatprep.subr.bf16.mxu0 0
        %821 = vmatpush1.bf16.msra.mxu0 0
        %822 = vmatprep.subr.bf16.mxu0 0
        %823 = vmatpush1.bf16.msra.mxu0 0
        %824 = vmatprep.subr.bf16.mxu0 0
        %825 = vmatpush1.bf16.msra.mxu0 0
        %826 = vmatprep.subr.bf16.mxu0 0
        %827 = vmatpush1.bf16.msra.mxu0 0
        %828 = vmatprep.subr.bf16.mxu0 0
        %829 = vmatpush1.bf16.msra.mxu0 0
        %830 = vmatprep.subr.bf16.mxu0 0
        %831 = vmatpush1.bf16.msra.mxu0 0
        %832 = vmatprep.subr.bf16.mxu0 0
        %833 = vmatpush1.bf16.msra.mxu0 0
        %834 = vmatprep.subr.bf16.mxu0 0
        %835 = vmatpush1.bf16.msra.mxu0 0
        %836 = vmatprep.subr.bf16.mxu0 0
        %837 = vmatpush1.bf16.msra.mxu0 0
        %838 = vmatprep.subr.bf16.mxu0 0
        %839 = vmatpush1.bf16.msra.mxu0 0
        %840 = vmatprep.subr.bf16.mxu0 0
        %841 = vmatpush1.bf16.msra.mxu0 0
        %842 = vmatprep.subr.bf16.mxu0 0
        %843 = vmatpush1.bf16.msra.mxu0 0
        %844 = vmatprep.mubr.bf16.mxu0 0
        %845 = vmatmul.mubr.bf16.gmra.mrb[0].mxu0 %v684
        %v846 = vpop.f32.mrb[0].mxu0
        %v847 = vadd.f32 %v798, %v846
        %v848 = vpop.f32.mrb[0].mxu0
        %v849 = vpop.f32.mrb[0].mxu0
        %v850 = vpop.f32.mrb[0].mxu0
        %851 = vdwg.mxu0
        %v852 = vld [vmem:[%s541] sm:$0xff]
        %v853 = vld [vmem:[%s550] sm:$0xff]
        %v854 = vmul.f32 %v721, %v852
        %v855 = vsub.f32 0.0, %v721
        %857 = vrot.lane.b32.xlu0 %v855, 124
        %v858 = vpop.permute.xlu0 %857
        %861 = vrot.lane.b32.xlu0 %v721, 4
        %v862 = vpop.permute.xlu0 %861
        %vm864 = vcmask 31744
        %v865 = vsel %vm864, %v858, %v862
        %v866 = vmul.f32 %v865, %v853
        %v867 = vadd.f32 %v854, %v866
        %v868 = vmul.f32 %v867, 0.35355338
        %v869 = vpack.c.bf16 %v868, %v868
        %vm870 = vcmask 60416
        %871 = vst.msk [vmem:[%s624] sm:$0xf] %vm870, %v869
        %873 = vrot.lane.b32.xlu0 %v852, 8
        %v874 = vpop.permute.xlu0 %873
        %v876 = vmul.f32 %v721, %v874
        %877 = vrot.lane.b32.xlu0 %v855, 116
        %v878 = vpop.permute.xlu0 %877
        %880 = vrot.lane.b32.xlu0 %v721, 124
        %v881 = vpop.permute.xlu0 %880
        %v883 = vsel %vm864, %v878, %v881
        %v884 = vmul.f32 %v883, %v853
        %886 = vrot.lane.b32.xlu0 %v884, 8
        %v887 = vpop.permute.xlu0 %886
        %v889 = vadd.f32 %v876, %v887
        %v890 = vmul.f32 %v889, 0.35355338
        %v891 = vpack.c.bf16 %v890, %v890
        %v893 = vunpack.c.l.b16 %v891
        %v894 = vpack.c.b16 %v893, %v893
        %895 = vrot.lane.b32.xlu0 %v894, 120
        %v896 = vpop.permute.xlu0 %895
        %s898 = scalar_lea.vmem %s624, 4 [#allocation19]
        %899 = vst.msk [vmem:[%s898] sm:$0xf] %vm870, %v896
        %900 = vrot.lane.b32.xlu0 %v852, 16
        %v901 = vpop.permute.xlu0 %900
        %v903 = vmul.f32 %v721, %v901
        %904 = vrot.lane.b32.xlu0 %v855, 108
        %v905 = vpop.permute.xlu0 %904
        %907 = vrot.lane.b32.xlu0 %v721, 116
        %v908 = vpop.permute.xlu0 %907
        %v910 = vsel %vm864, %v905, %v908
        %v911 = vmul.f32 %v910, %v853
        %913 = vrot.lane.b32.xlu0 %v911, 16
        %v914 = vpop.permute.xlu0 %913
        %v916 = vadd.f32 %v903, %v914
        %v917 = vmul.f32 %v916, 0.35355338
        %v918 = vpack.c.bf16 %v917, %v917
        %v920 = vunpack.c.l.b16 %v918
        %v921 = vpack.c.b16 %v920, %v920
        %922 = vrot.lane.b32.xlu0 %v921, 112
        %v923 = vpop.permute.xlu0 %922
        %s925 = scalar_lea.vmem %s624, 8 [#allocation19]
        %926 = vst.msk [vmem:[%s925] sm:$0xf] %vm870, %v923
        %927 = vrot.lane.b32.xlu0 %v852, 24
        %v928 = vpop.permute.xlu0 %927
        %v930 = vmul.f32 %v721, %v928
        %931 = vrot.lane.b32.xlu0 %v855, 100
        %v932 = vpop.permute.xlu0 %931
        %934 = vrot.lane.b32.xlu0 %v721, 108
        %v935 = vpop.permute.xlu0 %934
        %v937 = vsel %vm864, %v932, %v935
        %v938 = vmul.f32 %v937, %v853
        %940 = vrot.lane.b32.xlu0 %v938, 24
        %v941 = vpop.permute.xlu0 %940
        %v943 = vadd.f32 %v930, %v941
        %v944 = vmul.f32 %v943, 0.35355338
        %v945 = vpack.c.bf16 %v944, %v944
        %v947 = vunpack.c.l.b16 %v945
        %v948 = vpack.c.b16 %v947, %v947
        %949 = vrot.lane.b32.xlu0 %v948, 104
        %v950 = vpop.permute.xlu0 %949
        %s952 = scalar_lea.vmem %s624, 12 [#allocation19]
        %953 = vst.msk [vmem:[%s952] sm:$0xf] %vm870, %v950
        %v954 = vmul.f32 %v784, %v852
        %v955 = vsub.f32 0.0, %v784
        %957 = vrot.lane.b32.xlu0 %v955, 124
        %v958 = vpop.permute.xlu0 %957
        %961 = vrot.lane.b32.xlu0 %v784, 4
        %v962 = vpop.permute.xlu0 %961
        %v964 = vsel %vm864, %v958, %v962
        %v965 = vmul.f32 %v964, %v853
        %v966 = vadd.f32 %v954, %v965
        %v967 = vpack.c.bf16 %v966, %v966
        %968 = vst.msk [vmem:[%s631] sm:$0xf] %vm870, %v967
        %v969 = vpack.c.bf16 %v847, %v847
        %970 = vst.msk [vmem:[%s638] sm:$0xf] %vm870, %v969
        %v971 = vmul.f32 %v784, %v874
        %972 = vrot.lane.b32.xlu0 %v955, 116
        %v973 = vpop.permute.xlu0 %972
        %975 = vrot.lane.b32.xlu0 %v784, 124
        %v976 = vpop.permute.xlu0 %975
        %v978 = vsel %vm864, %v973, %v976
        %v979 = vmul.f32 %v978, %v853
        %981 = vrot.lane.b32.xlu0 %v979, 8
        %v982 = vpop.permute.xlu0 %981
        %v984 = vadd.f32 %v971, %v982
        %v985 = vpack.c.bf16 %v984, %v984
        %v987 = vunpack.c.l.b16 %v985
        %v988 = vpack.c.b16 %v987, %v987
        %989 = vrot.lane.b32.xlu0 %v988, 120
        %v990 = vpop.permute.xlu0 %989
        %s992 = scalar_lea.vmem %s631, 4 [#allocation20]
        %993 = vst.msk [vmem:[%s992] sm:$0xf] %vm870, %v990
        %v995 = vunpack.c.l.b16 %v969
        %v996 = vpack.c.b16 %v995, %v995
        %997 = vrot.lane.b32.xlu0 %v996, 120
        %v998 = vpop.permute.xlu0 %997
        %s1000 = scalar_lea.vmem %s638, 4 [#allocation22]
        %1001 = vst.msk [vmem:[%s1000] sm:$0xf] %vm870, %v998
        %s1002 = sand.u32 %s293, 1
        %s1003 = scalar_lea.sflag [#allocation4], %s1002
        %s1004 = sand.u32 %s293, 1
        %s1005 = smul.addr %s1004, 16
        %s1006 = scalar_lea.vmem [#allocation19], %s1005
        %s1007 = sand.u32 %s40, 1
        %s1008 = scalar_lea.sflag [#allocation21], %s1007
        %s1009 = sand.u32 %s321, 1
        %s1010 = smul.addr %s1009, 8
        %s1011 = scalar_lea.vmem [#allocation20], %s1010
        %s1012 = sand.u32 %s40, 1
        %s1013 = scalar_lea.sflag [#allocation21], %s1012
        %s1014 = sand.u32 %s349, 1
        %s1015 = smul.addr %s1014, 8
        %s1016 = scalar_lea.vmem [#allocation22], %s1015
        // Predicated region
        $region101: #{tpu_custom_call.1} parent=59 // pred_check
          %p1017 = pneg %p303
        $region102: #{tpu_custom_call.1} parent=59 // pred_check_branch
          %1019 = sbr.rel (%p1017) target = $region104
        $region103: #{tpu_custom_call.1} parent=59 // pred_region
          %s1021 = ssub.s32 256, 256
          %1022 = vsyncadd %s1003, %s1021
          %s1023 = smul.addr %s44, 4
          %s1024 = sadd.s32 %s45, %s1023
          %s1025 = smul.addr %s1024, 64
          %s1026 = scalar_lea.hbm %s10, %s1025
          %s1027 = sshll.u32 %s1006, 4
          %s1028 = int_to_ptr.vmem [resolvable:$true] %s1027
          %1033 = dma.vmem_to_hbm [thread:$0]  %s1028, 256, %s1026, %s1003, 64, 64, 4
        $region104: #{tpu_custom_call.1} parent=59 // pred_fallthru
          _
        // Predicated region
        $region105: #{tpu_custom_call.1} parent=59 // pred_check
          %p1034 = pneg %p331
        $region106: #{tpu_custom_call.1} parent=59 // pred_check_branch
          %1036 = sbr.rel (%p1034) target = $region108
        $region107: #{tpu_custom_call.1} parent=59 // pred_region
          %s1038 = ssub.s32 128, 128
          %1039 = vsyncadd %s1008, %s1038
          %s1040 = smul.addr %s44, 2
          %s1041 = sadd.s32 %s45, %s1040
          %s1042 = smul.addr %s1041, 64
          %s1043 = scalar_lea.hbm %s11, %s1042
          %s1044 = sshll.u32 %s1011, 4
          %s1045 = int_to_ptr.vmem [resolvable:$true] %s1044
          %1050 = dma.vmem_to_hbm [thread:$0]  %s1045, 128, %s1043, %s1008, 64, 64, 4
        $region108: #{tpu_custom_call.1} parent=59 // pred_fallthru
          _
        // Predicated region
        $region109: #{tpu_custom_call.1} parent=59 // pred_check
          %p1051 = pneg %p359
        $region110: #{tpu_custom_call.1} parent=59 // pred_check_branch
          %1053 = sbr.rel (%p1051) target = $region112
        $region111: #{tpu_custom_call.1} parent=59 // pred_region
          %s1055 = ssub.s32 128, 128
          %1056 = vsyncadd %s1013, %s1055
          %s1057 = smul.addr %s44, 2
          %s1058 = sadd.s32 %s45, %s1057
          %s1059 = smul.addr %s1058, 64
          %s1060 = scalar_lea.hbm %s12, %s1059
          %s1061 = sshll.u32 %s1016, 4
          %s1062 = int_to_ptr.vmem [resolvable:$true] %s1061
          %1067 = dma.vmem_to_hbm [thread:$0]  %s1062, 128, %s1060, %s1013, 64, 64, 4
        $region112: #{tpu_custom_call.1} parent=59 // pred_fallthru
          _
      $region60: #{tpu_custom_call.1} parent=5 // pred_fallthru
        _
      %p1068 = scmp.le.s32.totalorder 2, %s35
      // Predicated region
      $region113: #{tpu_custom_call.1} parent=5 // pred_check
        %p1069 = pneg %p1068
      $region114: #{tpu_custom_call.1} parent=5 // pred_check_branch
        %1071 = sbr.rel (%p1069) target = $region116
      $region115: #{tpu_custom_call.1} parent=5 // pred_region
        %s1072 = ssub.s32 %s35, 2
        // Predicated region
        $region117: #{tpu_custom_call.1} parent=115 // pred_check
          %p1073 = pneg %p309
        $region118: #{tpu_custom_call.1} parent=115 // pred_check_branch
          %1075 = sbr.rel (%p1073) target = $region120
        $region119: #{tpu_custom_call.1} parent=115 // pred_region
          %s1076 = sand.u32 %s294, 1
          %s1077 = scalar_lea.sflag [#allocation4], %s1076
          %s1078 = sand.u32 %s294, 1
          %s1079 = smul.addr %s1078, 16
          %s1080 = scalar_lea.vmem [#allocation19], %s1079
          %1081 = dma.done %s1077, 256
        $region120: #{tpu_custom_call.1} parent=115 // pred_fallthru
          _
        // Predicated region
        $region121: #{tpu_custom_call.1} parent=115 // pred_check
          %p1082 = pneg %p337
        $region122: #{tpu_custom_call.1} parent=115 // pred_check_branch
          %1084 = sbr.rel (%p1082) target = $region124
        $region123: #{tpu_custom_call.1} parent=115 // pred_region
          %s1085 = sand.u32 %s41, 1
          %s1086 = scalar_lea.sflag [#allocation21], %s1085
          %s1087 = sand.u32 %s322, 1
          %s1088 = smul.addr %s1087, 8
          %s1089 = scalar_lea.vmem [#allocation20], %s1088
          %1090 = dma.done %s1086, 128
        $region124: #{tpu_custom_call.1} parent=115 // pred_fallthru
          _
        // Predicated region
        $region125: #{tpu_custom_call.1} parent=115 // pred_check
          %p1091 = pneg %p365
        $region126: #{tpu_custom_call.1} parent=115 // pred_check_branch
          %1093 = sbr.rel (%p1091) target = $region128
        $region127: #{tpu_custom_call.1} parent=115 // pred_region
          %s1094 = sand.u32 %s41, 1
          %s1095 = scalar_lea.sflag [#allocation21], %s1094
          %s1096 = sand.u32 %s350, 1
          %s1097 = smul.addr %s1096, 8
          %s1098 = scalar_lea.vmem [#allocation22], %s1097
          %1099 = dma.done %s1095, 128
        $region128: #{tpu_custom_call.1} parent=115 // pred_fallthru
          _
      $region116: #{tpu_custom_call.1} parent=5 // pred_fallthru
        _
    $region6: #{tpu_custom_call.1} parent=1 // loop_footer
      %s39 = sadd.s32 1, %s35
    $region7: #{tpu_custom_call.1} parent=1 // loop_footer_branch
      %34 = sbr.rel target = $region3
    $region8: #{tpu_custom_call.1} parent=1 // loop_exit
      _
    %1100 = vsyncpa [#allocation3], 1
    %s1101 = scalar_lea.sflag [#allocation3], 1
    %1102 = vsyncpa %s1101, 1
    %1103 = vsyncpa [#allocation6], 1
    %s1104 = scalar_lea.sflag [#allocation6], 1
    %1105 = vsyncpa %s1104, 1
    %1106 = vsyncpa [#allocation9], 1
    %1107 = vsyncpa [#allocation12], 1
    %1108 = vsyncpa [#allocation15], 1
    %1109 = vsyncpa [#allocation18], 1
    %1110 = vsyncpa [#allocation4], 1
    %s1111 = scalar_lea.sflag [#allocation4], 1
    %1112 = vsyncpa %s1111, 1
    %1113 = vsyncpa [#allocation21], 1
    %s1114 = scalar_lea.sflag [#allocation21], 1
    %1115 = vsyncpa %s1114, 1

</llo_original>
